<compile_context>
chip_gen: v5e
topology: v5e:2x2
jax: 0.10.0
libtpu: 0.0.40
codegen_flags: <defaults>
</compile_context>

<pallas_src>
import math

import jax
import jax.numpy as jnp
from jax import lax
from jax.experimental import pallas as pl
from jax.experimental.pallas import tpu as pltpu


# ------------------------------ small helpers -------------------------------

def _round_up(x, m):
    return ((x + m - 1) // m) * m


def _choose_m_tiling(M):
    """(Mp, tm): padded row count and row tile.  Always >= 2 'parallel' blocks when the
    row count allows it (v7x has two TensorCores); tiles are multiples of 16 so bf16
    sublane packing stays aligned."""
    Mp = _round_up(max(M, 16), 16)
    if Mp <= 16:
        return Mp, Mp
    if Mp <= 1024:
        tm = _round_up((Mp + 1) // 2, 16)
        return 2 * tm, tm
    tm = 512
    return _round_up(Mp, tm), tm


_VMEM_LIMIT = 32 * 1024 * 1024   # safe on every generation incl. v7x (64 MiB physical)


# ------------------------------ Pallas kernels -------------------------------

def _conv1_kernel(x_ref, w_ref, s_ref, b_ref, o_ref):
    """o = relu((f32->bf16 x) @ w * scale + shift)   (conv1 + bn1 + relu)."""
    y = jnp.dot(x_ref[...].astype(jnp.bfloat16), w_ref[...],
                preferred_element_type=jnp.float32)
    y = jnp.maximum(y * s_ref[...] + b_ref[...], 0.0)
    o_ref[...] = y.astype(o_ref.dtype)


def _tail_ds_kernel(p_ref, xs_ref, w2_ref, s2_ref, b2_ref,
                    w3_ref, s3_ref, b3_ref, wd_ref, sd_ref, bd_ref, o_ref):
    """conv2+bn2+relu -> conv3+bn3, fused downsample(x)+bn_ds, residual add, relu."""
    h2 = jnp.dot(p_ref[...], w2_ref[...], preferred_element_type=jnp.float32)
    h2 = jnp.maximum(h2 * s2_ref[...] + b2_ref[...], 0.0).astype(jnp.bfloat16)
    y = jnp.dot(h2, w3_ref[...], preferred_element_type=jnp.float32)
    y = y * s3_ref[...] + b3_ref[...]
    idn = jnp.dot(xs_ref[...].astype(jnp.bfloat16), wd_ref[...],
                  preferred_element_type=jnp.float32)
    idn = idn * sd_ref[...] + bd_ref[...]
    o_ref[...] = jnp.maximum(y + idn, 0.0).astype(o_ref.dtype)


def _tail_res_kernel(p_ref, r_ref, w2_ref, s2_ref, b2_ref,
                     w3_ref, s3_ref, b3_ref, o_ref):
    """Same as above but the identity path is passed in directly (no downsample)."""
    h2 = jnp.dot(p_ref[...], w2_ref[...], preferred_element_type=jnp.float32)
    h2 = jnp.maximum(h2 * s2_ref[...] + b2_ref[...], 0.0).astype(jnp.bfloat16)
    y = jnp.dot(h2, w3_ref[...], preferred_element_type=jnp.float32)
    y = y * s3_ref[...] + b3_ref[...]
    o_ref[...] = jnp.maximum(y + r_ref[...].astype(jnp.float32), 0.0).astype(o_ref.dtype)


# ------------------------------ kernel wrappers -------------------------------

def _full_spec(arr):
    return pl.BlockSpec(arr.shape, lambda i: (0, 0))


def _fused_conv1(x2d, c1):
    """x2d: (M, cin_p) f32 -> (M, c1_p) bf16 = relu(bn1(conv1(x)))."""
    M, K = x2d.shape
    Np = c1["w_mat"].shape[1]
    Mp, tm = _choose_m_tiling(M)
    if Mp != M:
        x2d = jnp.pad(x2d, ((0, Mp - M), (0, 0)))
    out = pl.pallas_call(
        _conv1_kernel,
        out_shape=jax.ShapeDtypeStruct((Mp, Np), jnp.bfloat16),
        grid_spec=pltpu.PrefetchScalarGridSpec(
            num_scalar_prefetch=0,
            grid=(Mp // tm,),
            in_specs=[pl.BlockSpec((tm, K), lambda i: (i, 0)),
                      _full_spec(c1["w_mat"]),
                      _full_spec(c1["scale_p"]),
                      _full_spec(c1["shift_p"])],
            out_specs=pl.BlockSpec((tm, Np), lambda i: (i, 0))),
        compiler_params=pltpu.CompilerParams(
            dimension_semantics=("parallel",),
            vmem_limit_bytes=_VMEM_LIMIT),
    )(x2d, c1["w_mat"], c1["scale_p"], c1["shift_p"])
    return out if Mp == M else out[:M]


def _fused_tail(p2d, res2d, p, *, fuse_downsample):
    """p2d: (M, 9*c1_p) bf16 im2col of the conv1 output; res2d: (M, Kr) f32 — either
    the strided raw input (downsample fused in-kernel) or the identity activation."""
    c2, c3 = p["conv2"], p["conv3"]
    Np = c3["w_mat"].shape[1]
    M, K2 = p2d.shape
    Kr = res2d.shape[1]
    Mp, tm = _choose_m_tiling(M)
    if Mp != M:
        p2d = jnp.pad(p2d, ((0, Mp - M), (0, 0)))
        res2d = jnp.pad(res2d, ((0, Mp - M), (0, 0)))
    if fuse_downsample:
        cd = p["downsample"]
        kernel = _tail_ds_kernel
        extra_specs = [_full_spec(cd["w_mat"]), _full_spec(cd["scale_p"]),
                       _full_spec(cd["shift_p"])]
        extra_args = (cd["w_mat"], cd["scale_p"], cd["shift_p"])
    else:
        kernel = _tail_res_kernel
        extra_specs, extra_args = [], ()
    out = pl.pallas_call(
        kernel,
        out_shape=jax.ShapeDtypeStruct((Mp, Np), jnp.float32),
        grid_spec=pltpu.PrefetchScalarGridSpec(
            num_scalar_prefetch=0,
            grid=(Mp // tm,),
            in_specs=[pl.BlockSpec((tm, K2), lambda i: (i, 0)),
                      pl.BlockSpec((tm, Kr), lambda i: (i, 0)),
                      _full_spec(c2["w_mat"]), _full_spec(c2["scale_p"]),
                      _full_spec(c2["shift_p"]),
                      _full_spec(c3["w_mat"]), _full_spec(c3["scale_p"]),
                      _full_spec(c3["shift_p"]),
                      *extra_specs],
            out_specs=pl.BlockSpec((tm, Np), lambda i: (i, 0))),
        compiler_params=pltpu.CompilerParams(
            dimension_semantics=("parallel",),
            vmem_limit_bytes=_VMEM_LIMIT),
    )(p2d, res2d, c2["w_mat"], c2["scale_p"], c2["shift_p"],
      c3["w_mat"], c3["scale_p"], c3["shift_p"], *extra_args)
    return out if Mp == M else out[:M]


# ------------------------------ parameter setup -------------------------------

def conv_params(key, cin, cout, ksize, *, stride=1, padding=0, cin_pad=None,
                cout_pad=None):
    k1, k2, k3, k4 = jax.random.split(key, 4)
    fan_in = cin * ksize * ksize
    w_hwio = jax.random.normal(k1, (ksize, ksize, cin, cout), jnp.float32) / math.sqrt(fan_in)
    b = 0.01 * jax.random.normal(k2, (cout,), jnp.float32)
    gamma = 1.0 + 0.01 * jax.random.normal(k3, (cout,), jnp.float32)
    beta = 0.01 * jax.random.normal(k4, (cout,), jnp.float32)
    # eval-mode BN (running_mean=0, running_var=1, eps=1e-5) folded with the conv bias
    scale = gamma / jnp.sqrt(1.0 + 1e-5)
    shift = beta + scale * b

    cin_p = cin if cin_pad is None else cin_pad
    cout_p = _round_up(cout, 128) if cout_pad is None else cout_pad
    # Pad channels BEFORE flattening so the K ordering (cin-major, then kh, kw) matches
    # the channel-major feature order of lax.conv_general_dilated_patches applied to a
    # channel-padded activation.  Padded rows/cols are zero -> results are identical.
    w_pad = jnp.zeros((ksize, ksize, cin_p, cout_p), jnp.float32)
    w_pad = w_pad.at[:, :, :cin, :cout].set(w_hwio)
    w_mat = jnp.transpose(w_pad, (2, 0, 1, 3)).reshape(ksize * ksize * cin_p, cout_p)
    w_mat = w_mat.astype(jnp.bfloat16)                  # pre-pad + pre-cast ONCE
    scale_p = jnp.zeros((1, cout_p), jnp.float32).at[0, :cout].set(scale)
    shift_p = jnp.zeros((1, cout_p), jnp.float32).at[0, :cout].set(shift)
    return dict(w_hwio=w_hwio, scale=scale, shift=shift,
                w_mat=w_mat, scale_p=scale_p, shift_p=shift_p,
                k=ksize, stride=stride, padding=padding, cout=cout)


def make_residual_block(key, inplanes, planes, stride=1):
    p4 = planes // 4
    cin_p = _round_up(inplanes, 128)
    c1_p = _round_up(p4, 128)
    out_p = _round_up(planes, 128)
    k1, k2, k3, k4 = jax.random.split(key, 4)
    return dict(
        inplanes=inplanes, planes=planes, stride=stride, cin_p=cin_p,
        use_downsample=(inplanes != planes * 4),            # expansion == 4
        conv1=conv_params(k1, inplanes, p4, 1, cin_pad=cin_p, cout_pad=c1_p),
        conv2=conv_params(k2, p4, p4, 3, stride=stride, padding=1,
                          cin_pad=c1_p, cout_pad=c1_p),
        conv3=conv_params(k3, p4, planes, 1, cin_pad=c1_p, cout_pad=out_p),
        downsample=conv_params(k4, inplanes, planes, 1, stride=stride,
                               cin_pad=cin_p, cout_pad=out_p),
    )


# ------------------------------- block forward --------------------------------

def residual_block_fwd(p, x):
    """x: (N, H, W, inplanes) f32 NHWC -> (N, Ho, Wo, planes) f32."""
    N, H, W, cin = x.shape
    s = p["stride"]
    cin_p = p["cin_p"]
    planes = p["planes"]
    out_p = p["conv3"]["w_mat"].shape[1]

    # One channel pad to a lane-dense multiple of 128 (padded weight rows are zero).
    xp = x if cin_p == cin else jnp.pad(x, ((0, 0),) * 3 + ((0, cin_p - cin),))

    # conv1 + bn1 + relu  (f32 -> bf16 cast happens inside the kernel)
    h1 = _fused_conv1(xp.reshape(N * H * W, cin_p), p["conv1"])
    c1_p = h1.shape[1]

    # im2col of the conv1 output (3x3, stride, pad 1); channel-major feature order.
    patches = lax.conv_general_dilated_patches(
        h1.reshape(N, H, W, c1_p), (3, 3), (s, s), ((1, 1), (1, 1)),
        dimension_numbers=("NHWC", "HWIO", "NHWC"))
    _, Ho, Wo, k2 = patches.shape
    M2 = N * Ho * Wo
    p2d = patches.reshape(M2, k2)

    if p["use_downsample"]:
        xs = xp[:, ::s, ::s, :].reshape(M2, cin_p)        # f32, cast in-kernel
        out2d = _fused_tail(p2d, xs, p, fuse_downsample=True)
    else:
        # TODO(synk): the reference module's identity branch (inplanes == 4*planes) is
        # only shape-consistent when stride == 1 and inplanes == planes.
        ident = xp[:, ::s, ::s, :].reshape(M2, cin_p).astype(jnp.float32)
        if cin_p < out_p:
            ident = jnp.pad(ident, ((0, 0), (0, out_p - cin_p)))
        elif cin_p > out_p:
            ident = ident[:, :out_p]
        out2d = _fused_tail(p2d, ident, p, fuse_downsample=False)

    if out_p != planes:
        out2d = out2d[:, :planes]
    return out2d.reshape(N, Ho, Wo, planes)


# --------------------------- pure-JAX reference (check) ------------------------

def _conv_bn_ref(xb, cp, *, relu):
    y = lax.conv_general_dilated(
        xb, cp["w_hwio"].astype(jnp.bfloat16),
        window_strides=(cp["stride"], cp["stride"]),
        padding=((cp["padding"], cp["padding"]),) * 2,
        dimension_numbers=("NHWC", "HWIO", "NHWC"),
        preferred_element_type=jnp.float32)
    y = y * cp["scale"] + cp["shift"]
    return jnp.maximum(y, 0.0) if relu else y


def residual_block_ref(p, x):
    xb = x.astype(jnp.bfloat16)
    h1 = _conv_bn_ref(xb, p["conv1"], relu=True).astype(jnp.bfloat16)
    h2 = _conv_bn_ref(h1, p["conv2"], relu=True)
    y = _conv_bn_ref(h2.astype(jnp.bfloat16), p["conv3"], relu=False)
    if p["use_downsample"]:
        idn = _conv_bn_ref(xb, p["downsample"], relu=False)
    else:
        idn = x.astype(jnp.float32)
    return jnp.maximum(y + idn, 0.0)


# ----------------------------------- main ------------------------------------

if __name__ == "__main__":
    inplanes, planes, stride = 64, 128, 2

    key = jax.random.PRNGKey(0)
    k_param, k_x = jax.random.split(key)
    params = make_residual_block(k_param, inplanes, planes, stride)

    # PyTorch input would be NCHW (2, 64, 16, 16); this is the NHWC equivalent.
    x = jax.random.normal(k_x, (2, 16, 16, inplanes), jnp.float32)

    fwd = jax.jit(lambda inp: residual_block_fwd(params, inp))
    out = jax.block_until_ready(fwd(x))

    ref = jax.jit(lambda inp: residual_block_ref(params, inp))
    expected = jax.block_until_ready(ref(x))

    assert out.shape == (2, 16 // stride, 16 // stride, planes), out.shape
    assert bool(jnp.all(jnp.isfinite(out)))
    err = float(jnp.max(jnp.abs(out - expected)))
    assert err < 3e-2, f"max |pallas - ref| = {err}"

    print("KERNEL_OK")
</pallas_src>

<mosaic_0001>
module attributes {stable_mosaic.version = 11 : i64} {
  func.func @_conv1_kernel(%arg0: i32, %arg1: memref<256x128xf32, #tpu.memory_space<vmem>>, %arg2: memref<128x128xbf16, #tpu.memory_space<vmem>>, %arg3: memref<1x128xf32, #tpu.memory_space<vmem>>, %arg4: memref<1x128xf32, #tpu.memory_space<vmem>>, %arg5: memref<256x128xbf16, #tpu.memory_space<vmem>>) attributes {dimension_semantics = [#tpu.dimension_semantics<parallel>], iteration_bounds = array<i64: 2>, scalar_prefetch = 0 : i64, scratch_operands = 0 : i64, tpu.core_type = #tpu.core_type<tc>, window_params = [{transform_indices = @transform_0, window_bounds = array<i64: 256, 128>}, {pipeline_mode = #tpu.pipeline_mode<synchronous>, transform_indices = @transform_1, window_bounds = array<i64: 128, 128>}, {pipeline_mode = #tpu.pipeline_mode<synchronous>, transform_indices = @transform_2, window_bounds = array<i64: 1, 128>}, {pipeline_mode = #tpu.pipeline_mode<synchronous>, transform_indices = @transform_3, window_bounds = array<i64: 1, 128>}, {transform_indices = @transform_4, window_bounds = array<i64: 256, 128>}]} {
    %c0 = arith.constant 0 : index
    %c0_0 = arith.constant 0 : index
    %0 = vector.load %arg1[%c0, %c0_0] : memref<256x128xf32, #tpu.memory_space<vmem>>, vector<256x128xf32>
    %1 = arith.truncf %0 : vector<256x128xf32> to vector<256x128xbf16>
    %c0_1 = arith.constant 0 : index
    %c0_2 = arith.constant 0 : index
    %2 = vector.load %arg2[%c0_1, %c0_2] : memref<128x128xbf16, #tpu.memory_space<vmem>>, vector<128x128xbf16>
    %cst = arith.constant dense<0.000000e+00> : vector<256x128xf32>
    %3 = tpu.matmul %1, %2, %cst {dimension_numbers = #tpu.dot_dimension_numbers<[1], [0], [0], [1], [0, 0, 1, 1], [], []>} : vector<256x128xbf16>, vector<128x128xbf16>, vector<256x128xf32> -> vector<256x128xf32>
    %c0_3 = arith.constant 0 : index
    %c0_4 = arith.constant 0 : index
    %4 = vector.load %arg3[%c0_3, %c0_4] : memref<1x128xf32, #tpu.memory_space<vmem>>, vector<1x128xf32>
    %5 = vector.broadcast %4 : vector<1x128xf32> to vector<256x128xf32>
    %6 = arith.mulf %3, %5 : vector<256x128xf32>
    %c0_5 = arith.constant 0 : index
    %c0_6 = arith.constant 0 : index
    %7 = vector.load %arg4[%c0_5, %c0_6] : memref<1x128xf32, #tpu.memory_space<vmem>>, vector<1x128xf32>
    %8 = vector.broadcast %7 : vector<1x128xf32> to vector<256x128xf32>
    %9 = arith.addf %6, %8 : vector<256x128xf32>
    %cst_7 = arith.constant 0.000000e+00 : f32
    %10 = vector.broadcast %cst_7 : f32 to vector<256x128xf32>
    %11 = arith.maximumf %9, %10 : vector<256x128xf32>
    %12 = arith.truncf %11 : vector<256x128xf32> to vector<256x128xbf16>
    %c0_8 = arith.constant 0 : index
    %c0_9 = arith.constant 0 : index
    %13 = vector.load %arg5[%c0_8, %c0_9] : memref<256x128xbf16, #tpu.memory_space<vmem>>, vector<256x128xbf16>
    tpu.vector_store %arg5[%c0_8, %c0_9], %12 {strides = array<i32>} : memref<256x128xbf16, #tpu.memory_space<vmem>>, vector<256x128xbf16>,
    return
  }
  func.func @transform_0(%arg0: i32) -> (i32, i32) {
    %c0_i32 = arith.constant 0 : i32
    %c0_i32_0 = arith.constant 0 : i32
    return %arg0, %c0_i32 : i32, i32
  }
  func.func @transform_1(%arg0: i32) -> (i32, i32) {
    %c0_i32 = arith.constant 0 : i32
    %c0_i32_0 = arith.constant 0 : i32
    %c0_i32_1 = arith.constant 0 : i32
    return %c0_i32, %c0_i32_0 : i32, i32
  }
  func.func @transform_2(%arg0: i32) -> (i32, i32) {
    %c0_i32 = arith.constant 0 : i32
    %c0_i32_0 = arith.constant 0 : i32
    %c0_i32_1 = arith.constant 0 : i32
    return %c0_i32, %c0_i32_0 : i32, i32
  }
  func.func @transform_3(%arg0: i32) -> (i32, i32) {
    %c0_i32 = arith.constant 0 : i32
    %c0_i32_0 = arith.constant 0 : i32
    %c0_i32_1 = arith.constant 0 : i32
    return %c0_i32, %c0_i32_0 : i32, i32
  }
  func.func @transform_4(%arg0: i32) -> (i32, i32) {
    %c0_i32 = arith.constant 0 : i32
    %c0_i32_0 = arith.constant 0 : i32
    return %arg0, %c0_i32 : i32, i32
  }
}

module attributes {stable_mosaic.version = 11 : i64} {
  func.func @_tail_ds_kernel(%arg0: i32, %arg1: memref<64x1152xbf16, #tpu.memory_space<vmem>>, %arg2: memref<64x128xf32, #tpu.memory_space<vmem>>, %arg3: memref<1152x128xbf16, #tpu.memory_space<vmem>>, %arg4: memref<1x128xf32, #tpu.memory_space<vmem>>, %arg5: memref<1x128xf32, #tpu.memory_space<vmem>>, %arg6: memref<128x128xbf16, #tpu.memory_space<vmem>>, %arg7: memref<1x128xf32, #tpu.memory_space<vmem>>, %arg8: memref<1x128xf32, #tpu.memory_space<vmem>>, %arg9: memref<128x128xbf16, #tpu.memory_space<vmem>>, %arg10: memref<1x128xf32, #tpu.memory_space<vmem>>, %arg11: memref<1x128xf32, #tpu.memory_space<vmem>>, %arg12: memref<64x128xf32, #tpu.memory_space<vmem>>) attributes {dimension_semantics = [#tpu.dimension_semantics<parallel>], iteration_bounds = array<i64: 2>, scalar_prefetch = 0 : i64, scratch_operands = 0 : i64, tpu.core_type = #tpu.core_type<tc>, window_params = [{transform_indices = @transform_0, window_bounds = array<i64: 64, 1152>}, {transform_indices = @transform_1, window_bounds = array<i64: 64, 128>}, {pipeline_mode = #tpu.pipeline_mode<synchronous>, transform_indices = @transform_2, window_bounds = array<i64: 1152, 128>}, {pipeline_mode = #tpu.pipeline_mode<synchronous>, transform_indices = @transform_3, window_bounds = array<i64: 1, 128>}, {pipeline_mode = #tpu.pipeline_mode<synchronous>, transform_indices = @transform_4, window_bounds = array<i64: 1, 128>}, {pipeline_mode = #tpu.pipeline_mode<synchronous>, transform_indices = @transform_5, window_bounds = array<i64: 128, 128>}, {pipeline_mode = #tpu.pipeline_mode<synchronous>, transform_indices = @transform_6, window_bounds = array<i64: 1, 128>}, {pipeline_mode = #tpu.pipeline_mode<synchronous>, transform_indices = @transform_7, window_bounds = array<i64: 1, 128>}, {pipeline_mode = #tpu.pipeline_mode<synchronous>, transform_indices = @transform_8, window_bounds = array<i64: 128, 128>}, {pipeline_mode = #tpu.pipeline_mode<synchronous>, transform_indices = @transform_9, window_bounds = array<i64: 1, 128>}, {pipeline_mode = #tpu.pipeline_mode<synchronous>, transform_indices = @transform_10, window_bounds = array<i64: 1, 128>}, {transform_indices = @transform_11, window_bounds = array<i64: 64, 128>}]} {
    %c0 = arith.constant 0 : index
    %c0_0 = arith.constant 0 : index
    %0 = vector.load %arg1[%c0, %c0_0] : memref<64x1152xbf16, #tpu.memory_space<vmem>>, vector<64x1152xbf16>
    %c0_1 = arith.constant 0 : index
    %c0_2 = arith.constant 0 : index
    %1 = vector.load %arg3[%c0_1, %c0_2] : memref<1152x128xbf16, #tpu.memory_space<vmem>>, vector<1152x128xbf16>
    %cst = arith.constant dense<0.000000e+00> : vector<64x128xf32>
    %2 = tpu.matmul %0, %1, %cst {dimension_numbers = #tpu.dot_dimension_numbers<[1], [0], [0], [1], [0, 0, 1, 1], [], []>} : vector<64x1152xbf16>, vector<1152x128xbf16>, vector<64x128xf32> -> vector<64x128xf32>
    %c0_3 = arith.constant 0 : index
    %c0_4 = arith.constant 0 : index
    %3 = vector.load %arg4[%c0_3, %c0_4] : memref<1x128xf32, #tpu.memory_space<vmem>>, vector<1x128xf32>
    %4 = vector.broadcast %3 : vector<1x128xf32> to vector<64x128xf32>
    %5 = arith.mulf %2, %4 : vector<64x128xf32>
    %c0_5 = arith.constant 0 : index
    %c0_6 = arith.constant 0 : index
    %6 = vector.load %arg5[%c0_5, %c0_6] : memref<1x128xf32, #tpu.memory_space<vmem>>, vector<1x128xf32>
    %7 = vector.broadcast %6 : vector<1x128xf32> to vector<64x128xf32>
    %8 = arith.addf %5, %7 : vector<64x128xf32>
    %cst_7 = arith.constant 0.000000e+00 : f32
    %9 = vector.broadcast %cst_7 : f32 to vector<64x128xf32>
    %10 = arith.maximumf %8, %9 : vector<64x128xf32>
    %11 = arith.truncf %10 : vector<64x128xf32> to vector<64x128xbf16>
    %c0_8 = arith.constant 0 : index
    %c0_9 = arith.constant 0 : index
    %12 = vector.load %arg6[%c0_8, %c0_9] : memref<128x128xbf16, #tpu.memory_space<vmem>>, vector<128x128xbf16>
    %cst_10 = arith.constant dense<0.000000e+00> : vector<64x128xf32>
    %13 = tpu.matmul %11, %12, %cst_10 {dimension_numbers = #tpu.dot_dimension_numbers<[1], [0], [0], [1], [0, 0, 1, 1], [], []>} : vector<64x128xbf16>, vector<128x128xbf16>, vector<64x128xf32> -> vector<64x128xf32>
    %c0_11 = arith.constant 0 : index
    %c0_12 = arith.constant 0 : index
    %14 = vector.load %arg7[%c0_11, %c0_12] : memref<1x128xf32, #tpu.memory_space<vmem>>, vector<1x128xf32>
    %15 = vector.broadcast %14 : vector<1x128xf32> to vector<64x128xf32>
    %16 = arith.mulf %13, %15 : vector<64x128xf32>
    %c0_13 = arith.constant 0 : index
    %c0_14 = arith.constant 0 : index
    %17 = vector.load %arg8[%c0_13, %c0_14] : memref<1x128xf32, #tpu.memory_space<vmem>>, vector<1x128xf32>
    %18 = vector.broadcast %17 : vector<1x128xf32> to vector<64x128xf32>
    %19 = arith.addf %16, %18 : vector<64x128xf32>
    %c0_15 = arith.constant 0 : index
    %c0_16 = arith.constant 0 : index
    %20 = vector.load %arg2[%c0_15, %c0_16] : memref<64x128xf32, #tpu.memory_space<vmem>>, vector<64x128xf32>
    %21 = arith.truncf %20 : vector<64x128xf32> to vector<64x128xbf16>
    %c0_17 = arith.constant 0 : index
    %c0_18 = arith.constant 0 : index
    %22 = vector.load %arg9[%c0_17, %c0_18] : memref<128x128xbf16, #tpu.memory_space<vmem>>, vector<128x128xbf16>
    %cst_19 = arith.constant dense<0.000000e+00> : vector<64x128xf32>
    %23 = tpu.matmul %21, %22, %cst_19 {dimension_numbers = #tpu.dot_dimension_numbers<[1], [0], [0], [1], [0, 0, 1, 1], [], []>} : vector<64x128xbf16>, vector<128x128xbf16>, vector<64x128xf32> -> vector<64x128xf32>
    %c0_20 = arith.constant 0 : index
    %c0_21 = arith.constant 0 : index
    %24 = vector.load %arg10[%c0_20, %c0_21] : memref<1x128xf32, #tpu.memory_space<vmem>>, vector<1x128xf32>
    %25 = vector.broadcast %24 : vector<1x128xf32> to vector<64x128xf32>
    %26 = arith.mulf %23, %25 : vector<64x128xf32>
    %c0_22 = arith.constant 0 : index
    %c0_23 = arith.constant 0 : index
    %27 = vector.load %arg11[%c0_22, %c0_23] : memref<1x128xf32, #tpu.memory_space<vmem>>, vector<1x128xf32>
    %28 = vector.broadcast %27 : vector<1x128xf32> to vector<64x128xf32>
    %29 = arith.addf %26, %28 : vector<64x128xf32>
    %30 = arith.addf %19, %29 : vector<64x128xf32>
    %cst_24 = arith.constant 0.000000e+00 : f32
    %31 = vector.broadcast %cst_24 : f32 to vector<64x128xf32>
    %32 = arith.maximumf %30, %31 : vector<64x128xf32>
    %c0_25 = arith.constant 0 : index
    %c0_26 = arith.constant 0 : index
    %33 = vector.load %arg12[%c0_25, %c0_26] : memref<64x128xf32, #tpu.memory_space<vmem>>, vector<64x128xf32>
    tpu.vector_store %arg12[%c0_25, %c0_26], %32 {strides = array<i32>} : memref<64x128xf32, #tpu.memory_space<vmem>>, vector<64x128xf32>,
    return
  }
  func.func @transform_0(%arg0: i32) -> (i32, i32) {
    %c0_i32 = arith.constant 0 : i32
    %c0_i32_0 = arith.constant 0 : i32
    return %arg0, %c0_i32 : i32, i32
  }
  func.func @transform_1(%arg0: i32) -> (i32, i32) {
    %c0_i32 = arith.constant 0 : i32
    %c0_i32_0 = arith.constant 0 : i32
    return %arg0, %c0_i32 : i32, i32
  }
  func.func @transform_2(%arg0: i32) -> (i32, i32) {
    %c0_i32 = arith.constant 0 : i32
    %c0_i32_0 = arith.constant 0 : i32
    %c0_i32_1 = arith.constant 0 : i32
    return %c0_i32, %c0_i32_0 : i32, i32
  }
  func.func @transform_3(%arg0: i32) -> (i32, i32) {
    %c0_i32 = arith.constant 0 : i32
    %c0_i32_0 = arith.constant 0 : i32
    %c0_i32_1 = arith.constant 0 : i32
    return %c0_i32, %c0_i32_0 : i32, i32
  }
  func.func @transform_4(%arg0: i32) -> (i32, i32) {
    %c0_i32 = arith.constant 0 : i32
    %c0_i32_0 = arith.constant 0 : i32
    %c0_i32_1 = arith.constant 0 : i32
    return %c0_i32, %c0_i32_0 : i32, i32
  }
  func.func @transform_5(%arg0: i32) -> (i32, i32) {
    %c0_i32 = arith.constant 0 : i32
    %c0_i32_0 = arith.constant 0 : i32
    %c0_i32_1 = arith.constant 0 : i32
    return %c0_i32, %c0_i32_0 : i32, i32
  }
  func.func @transform_6(%arg0: i32) -> (i32, i32) {
    %c0_i32 = arith.constant 0 : i32
    %c0_i32_0 = arith.constant 0 : i32
    %c0_i32_1 = arith.constant 0 : i32
    return %c0_i32, %c0_i32_0 : i32, i32
  }
  func.func @transform_7(%arg0: i32) -> (i32, i32) {
    %c0_i32 = arith.constant 0 : i32
    %c0_i32_0 = arith.constant 0 : i32
    %c0_i32_1 = arith.constant 0 : i32
    return %c0_i32, %c0_i32_0 : i32, i32
  }
  func.func @transform_8(%arg0: i32) -> (i32, i32) {
    %c0_i32 = arith.constant 0 : i32
    %c0_i32_0 = arith.constant 0 : i32
    %c0_i32_1 = arith.constant 0 : i32
    return %c0_i32, %c0_i32_0 : i32, i32
  }
  func.func @transform_9(%arg0: i32) -> (i32, i32) {
    %c0_i32 = arith.constant 0 : i32
    %c0_i32_0 = arith.constant 0 : i32
    %c0_i32_1 = arith.constant 0 : i32
    return %c0_i32, %c0_i32_0 : i32, i32
  }
  func.func @transform_10(%arg0: i32) -> (i32, i32) {
    %c0_i32 = arith.constant 0 : i32
    %c0_i32_0 = arith.constant 0 : i32
    %c0_i32_1 = arith.constant 0 : i32
    return %c0_i32, %c0_i32_0 : i32, i32
  }
  func.func @transform_11(%arg0: i32) -> (i32, i32) {
    %c0_i32 = arith.constant 0 : i32
    %c0_i32_0 = arith.constant 0 : i32
    return %arg0, %c0_i32 : i32, i32
  }
}

</mosaic_0001>

<llo_original>
// kernel: _lambda_.2
$region0: #{_lambda_.2}
  #allocation0 [shape = 'u32[]', space=smem, size = 0x4, offset = 0x4, fixed_abs, tag = 'smem constant byte address 0x4 - core index']
  #allocation1 [shape = 'u32[72,128]{1,0:T(1,128)}', space=vmem, size = 0x9000, scoped, tag = 'internal scratch']
  %s0 = inlined_call_operand.vmem [shape: f32[512,128], index: 0, kind: input, shape index: {}]
  %s1 = inlined_call_operand.hbm [shape: bf16[128,128], index: 1, kind: input, shape index: {}]
  %s2 = inlined_call_operand.hbm [shape: f32[1,128], index: 2, kind: input, shape index: {}]
  %s3 = inlined_call_operand.hbm [shape: f32[1,128], index: 3, kind: input, shape index: {}]
  %s4 = inlined_call_operand.vmem [shape: bf16[512,128], index: 4, kind: output, shape index: {}]
  %s5 = sld [smem:[#allocation0]]
  $region61: #{_lambda_.2} parent=0
    _
  %s7 = ssub.s32 1, %s5
  %s8 = scalar_select 0, %s7, %s5
  $region1: #{_lambda_.2} parent=0
    #allocation2 [shape = 'u8[32768]{0}', space=vmem, size = 0x8000, scoped, tag = 'input window, operand 1, single buffered']
    #allocation3 [shape = 's32[2]{0}', space=sflag, size = 0x8, scoped, tag = 'scoped memory for _lambda_.2']
    #allocation4 [shape = 'u8[512]{0}', space=vmem, size = 0x400, scoped, tag = 'input window, operand 2, single buffered']
    #allocation5 [shape = 's32[1]{0}', space=sflag, size = 0x4, scoped, tag = 'scoped memory for _lambda_.2']
    #allocation6 [shape = 'u8[512]{0}', space=vmem, size = 0x400, scoped, tag = 'input window, operand 3, single buffered']
    %9 = vsyncpa [#allocation3], 0
    %10 = vsyncpa [#allocation5], 0
    loop: start=0, step=1, limit=4
    $region2: #{_lambda_.2} parent=1 // loop_pre_header
      _
    $region3: #{_lambda_.2} parent=1 // loop_header
      %s12 = sphi 0, %s16
      %p13 = scmp.ge.s32.totalorder %s12, 4
      %s22 = sphi 0, %s24
      %s25 = sphi 0, %s22
      %s26 = sphi 0, %s25
      %s42 = sphi 0, %s26
      %s46 = sphi 0, %s46
      %s48 = sphi 0, %s46
      %s49 = sphi 0, %s48
      %s63 = sphi 0, %s49
      %s67 = sphi 0, %s67
      %s69 = sphi 0, %s67
      %s70 = sphi 0, %s69
      %s84 = sphi 0, %s70
      %s88 = sphi 0, %s88
      %s90 = sphi 0, %s88
      %s91 = sphi 0, %s90
      %s105 = sphi 0, %s91
      %s111 = sphi 0, %s113
      %s114 = sphi 0, %s111
      %s115 = sphi 0, %s114
      %s131 = sphi 0, %s115
    $region4: #{_lambda_.2} parent=1 // loop_header_branch
      %15 = sbr.rel (%p13) target = $region8
    $region5: #{_lambda_.2} parent=1 // loop_body
      %s17 = ssub.s32 %s12, 1
      %s18 = ssub.s32 %s12, 2
      %s19 = sadd.s32 %s12, 1
      %s20 = ssub.s32 %s12, %s19
      %p21 = scmp.eq.s32.totalorder %s20, 0
      %s23 = sadd.s32 %s22, 1
      %s24 = scalar_select %p21, %s22, %s23
      %p27 = pneg %p21
      %p28 = scmp.eq.s32.totalorder %s12, 1
      %p29 = por %p27, %p28
      %p30 = scmp.ne.s32.totalorder %s22, %s25
      %p31 = scmp.eq.s32.totalorder %s12, 0
      %p32 = por %p30, %p31
      %p33 = scmp.ne.s32.totalorder %s22, %s25
      %p34 = scmp.eq.s32.totalorder %s17, 1
      %p35 = por %p33, %p34
      %p36 = scmp.ne.s32.totalorder %s25, %s26
      %p37 = scmp.eq.s32.totalorder %s17, 0
      %p38 = por %p36, %p37
      %p39 = scmp.ne.s32.totalorder %s25, %s26
      %p40 = scmp.eq.s32.totalorder %s18, 1
      %p41 = por %p39, %p40
      %p43 = scmp.ne.s32.totalorder %s26, %s42
      %p44 = scmp.eq.s32.totalorder %s18, 0
      %p45 = por %p43, %p44
      %s47 = sadd.s32 %s46, 1
      %p50 = scmp.eq.s32.totalorder %s12, 1
      %p51 = scmp.ne.s32.totalorder %s46, %s48
      %p52 = scmp.eq.s32.totalorder %s12, 0
      %p53 = por %p51, %p52
      %p54 = scmp.ne.s32.totalorder %s46, %s48
      %p55 = scmp.eq.s32.totalorder %s17, 1
      %p56 = por %p54, %p55
      %p57 = scmp.ne.s32.totalorder %s48, %s49
      %p58 = scmp.eq.s32.totalorder %s17, 0
      %p59 = por %p57, %p58
      %p60 = scmp.ne.s32.totalorder %s48, %s49
      %p61 = scmp.eq.s32.totalorder %s18, 1
      %p62 = por %p60, %p61
      %p64 = scmp.ne.s32.totalorder %s49, %s63
      %p65 = scmp.eq.s32.totalorder %s18, 0
      %p66 = por %p64, %p65
      %s68 = sadd.s32 %s67, 1
      %p71 = scmp.eq.s32.totalorder %s12, 1
      %p72 = scmp.ne.s32.totalorder %s67, %s69
      %p73 = scmp.eq.s32.totalorder %s12, 0
      %p74 = por %p72, %p73
      %p75 = scmp.ne.s32.totalorder %s67, %s69
      %p76 = scmp.eq.s32.totalorder %s17, 1
      %p77 = por %p75, %p76
      %p78 = scmp.ne.s32.totalorder %s69, %s70
      %p79 = scmp.eq.s32.totalorder %s17, 0
      %p80 = por %p78, %p79
      %p81 = scmp.ne.s32.totalorder %s69, %s70
      %p82 = scmp.eq.s32.totalorder %s18, 1
      %p83 = por %p81, %p82
      %p85 = scmp.ne.s32.totalorder %s70, %s84
      %p86 = scmp.eq.s32.totalorder %s18, 0
      %p87 = por %p85, %p86
      %s89 = sadd.s32 %s88, 1
      %p92 = scmp.eq.s32.totalorder %s12, 1
      %p93 = scmp.ne.s32.totalorder %s88, %s90
      %p94 = scmp.eq.s32.totalorder %s12, 0
      %p95 = por %p93, %p94
      %p96 = scmp.ne.s32.totalorder %s88, %s90
      %p97 = scmp.eq.s32.totalorder %s17, 1
      %p98 = por %p96, %p97
      %p99 = scmp.ne.s32.totalorder %s90, %s91
      %p100 = scmp.eq.s32.totalorder %s17, 0
      %p101 = por %p99, %p100
      %p102 = scmp.ne.s32.totalorder %s90, %s91
      %p103 = scmp.eq.s32.totalorder %s18, 1
      %p104 = por %p102, %p103
      %p106 = scmp.ne.s32.totalorder %s91, %s105
      %p107 = scmp.eq.s32.totalorder %s18, 0
      %p108 = por %p106, %p107
      %s109 = ssub.s32 %s12, %s19
      %p110 = scmp.eq.s32.totalorder %s109, 0
      %s112 = sadd.s32 %s111, 1
      %s113 = scalar_select %p110, %s111, %s112
      %p116 = pneg %p110
      %p117 = scmp.eq.s32.totalorder %s12, 1
      %p118 = por %p116, %p117
      %p119 = scmp.ne.s32.totalorder %s111, %s114
      %p120 = scmp.eq.s32.totalorder %s12, 0
      %p121 = por %p119, %p120
      %p122 = scmp.ne.s32.totalorder %s111, %s114
      %p123 = scmp.eq.s32.totalorder %s17, 1
      %p124 = por %p122, %p123
      %p125 = scmp.ne.s32.totalorder %s114, %s115
      %p126 = scmp.eq.s32.totalorder %s17, 0
      %p127 = por %p125, %p126
      %p128 = scmp.ne.s32.totalorder %s114, %s115
      %p129 = scmp.eq.s32.totalorder %s18, 1
      %p130 = por %p128, %p129
      %p132 = scmp.ne.s32.totalorder %s115, %s131
      %p133 = scmp.eq.s32.totalorder %s18, 0
      %p134 = por %p132, %p133
      %p135 = scmp.le.s32.totalorder 1, %s12
      %p136 = scmp.lt.s32.totalorder %s12, 3
      %p137 = pnand %p135, %p136
      %p138 = pneg %p137
      // Predicated region
      $region9: #{_lambda_.2} parent=5 // pred_check
        _
      $region10: #{_lambda_.2} parent=5 // pred_check_branch
        %140 = sbr.rel (%p137) target = $region12
      $region11: #{_lambda_.2} parent=5 // pred_region
        %s141 = ssub.s32 %s12, 1
        // Predicated region
        $region13: #{_lambda_.2} parent=11 // pred_check
          %p142 = pneg %p59
        $region14: #{_lambda_.2} parent=11 // pred_check_branch
          %144 = sbr.rel (%p142) target = $region16
        $region15: #{_lambda_.2} parent=11 // pred_region
          %146 = vsyncadd [#allocation3], 0
          %s147 = sshll.u32 %s1, 4
          %s148 = int_to_ptr.hbm [resolvable:$true] %s147
          %s149 = sshll.u32 [#allocation2], 4
          %s150 = int_to_ptr.vmem [resolvable:$true] %s149
          %155 = dma.hbm_to_vmem [thread:$0]  %s148, 1024, %s150, [#allocation3], 64, 64, 4
        $region16: #{_lambda_.2} parent=11 // pred_fallthru
          _
        // Predicated region
        $region17: #{_lambda_.2} parent=11 // pred_check
          %p156 = pneg %p80
        $region18: #{_lambda_.2} parent=11 // pred_check_branch
          %158 = sbr.rel (%p156) target = $region20
        $region19: #{_lambda_.2} parent=11 // pred_region
          %160 = vsyncadd [#allocation5], 0
          %s162 = sshll.u32 %s2, 4
          %s163 = int_to_ptr.hbm [resolvable:$true] %s162
          %s164 = sshll.u32 [#allocation4], 4
          %s165 = int_to_ptr.vmem [resolvable:$true] %s164
          %167 = dma.hbm_to_vmem [thread:$0]  %s163, 16, %s165, [#allocation5]
        $region20: #{_lambda_.2} parent=11 // pred_fallthru
          _
        // Predicated region
        $region21: #{_lambda_.2} parent=11 // pred_check
          %p168 = pneg %p101
        $region22: #{_lambda_.2} parent=11 // pred_check_branch
          %170 = sbr.rel (%p168) target = $region24
        $region23: #{_lambda_.2} parent=11 // pred_region
          %172 = vsyncadd [#allocation5], 0
          %s174 = sshll.u32 %s3, 4
          %s175 = int_to_ptr.hbm [resolvable:$true] %s174
          %s176 = sshll.u32 [#allocation6], 4
          %s177 = int_to_ptr.vmem [resolvable:$true] %s176
          %179 = dma.hbm_to_vmem [thread:$0]  %s175, 16, %s177, [#allocation5]
        $region24: #{_lambda_.2} parent=11 // pred_fallthru
          _
      $region12: #{_lambda_.2} parent=5 // pred_fallthru
        _
      %p180 = scmp.lt.s32.totalorder %s12, 2
      // Predicated region
      $region25: #{_lambda_.2} parent=5 // pred_check
        %p181 = pneg %p180
      $region26: #{_lambda_.2} parent=5 // pred_check_branch
        %183 = sbr.rel (%p181) target = $region28
      $region27: #{_lambda_.2} parent=5 // pred_region
        // Predicated region
        $region29: #{_lambda_.2} parent=27 // pred_check
          %p184 = pneg %p32
        $region30: #{_lambda_.2} parent=27 // pred_check_branch
          %186 = sbr.rel (%p184) target = $region32
        $region31: #{_lambda_.2} parent=27 // pred_region
          %s187 = smul.u32 32, %s12
          %p188 = scmp.lt.s32.totalorder %s187, 63
          %s189 = scalar_select %p188, %s187, 63
          %s190 = smul.addr %s189, 8
          %s191 = scalar_lea.vmem %s0, %s190
          %s192 = smul.u32 32, %s12
        $region32: #{_lambda_.2} parent=27 // pred_fallthru
          _
      $region28: #{_lambda_.2} parent=5 // pred_fallthru
        _
      %p193 = scmp.le.s32.totalorder 1, %s12
      %p194 = scmp.lt.s32.totalorder %s12, 3
      %p195 = pnand %p193, %p194
      %p196 = pneg %p195
      // Predicated region
      $region33: #{_lambda_.2} parent=5 // pred_check
        _
      $region34: #{_lambda_.2} parent=5 // pred_check_branch
        %198 = sbr.rel (%p195) target = $region36
      $region35: #{_lambda_.2} parent=5 // pred_region
        %s199 = ssub.s32 %s12, 1
        // Predicated region
        $region37: #{_lambda_.2} parent=35 // pred_check
          %p200 = pneg %p59
        $region38: #{_lambda_.2} parent=35 // pred_check_branch
          %202 = sbr.rel (%p200) target = $region40
        $region39: #{_lambda_.2} parent=35 // pred_region
          %204 = dma.done [#allocation3], 1024
        $region40: #{_lambda_.2} parent=35 // pred_fallthru
          _
        // Predicated region
        $region41: #{_lambda_.2} parent=35 // pred_check
          %p205 = pneg %p80
        $region42: #{_lambda_.2} parent=35 // pred_check_branch
          %207 = sbr.rel (%p205) target = $region44
        $region43: #{_lambda_.2} parent=35 // pred_region
          %209 = dma.done [#allocation5], 16
        $region44: #{_lambda_.2} parent=35 // pred_fallthru
          _
        // Predicated region
        $region45: #{_lambda_.2} parent=35 // pred_check
          %p210 = pneg %p101
        $region46: #{_lambda_.2} parent=35 // pred_check_branch
          %212 = sbr.rel (%p210) target = $region48
        $region47: #{_lambda_.2} parent=35 // pred_region
          %214 = dma.done [#allocation5], 16
        $region48: #{_lambda_.2} parent=35 // pred_fallthru
          _
        %s215 = smul.u32 32, %s17
        %p216 = scmp.lt.s32.totalorder %s215, 63
        %s217 = scalar_select %p216, %s215, 63
        %s218 = smul.addr %s217, 8
        %s219 = scalar_lea.vmem %s0, %s218
        %p220 = pneg %p38
        %p221 = pneg %p35
        %p222 = pneg %p59
        %p223 = pneg %p56
        %p224 = pneg %p80
        %p225 = pneg %p77
        %p226 = pneg %p101
        %p227 = pneg %p98
        %p228 = pneg %p127
        %p229 = pneg %p124
        %s230 = smul.u32 32, %s17
        %p231 = scmp.lt.s32.totalorder %s230, 63
        %s232 = scalar_select %p231, %s230, 63
        %s233 = smul.addr %s232, 4
        %s234 = scalar_lea.vmem %s4, %s233
        %s235 = smul.u32 32, %s17
        %p236 = scmp.lt.s32.totalorder %s235, 63
        %s237 = scalar_select %p236, %s235, 63
        %s238 = smul.addr %s237, 8
        %s239 = scalar_lea.vmem %s0, %s238
        %s240 = smul.u32 32, %s17
        %s241 = smul.u32 32, %s17
        %p242 = scmp.lt.s32.totalorder %s241, 63
        %s243 = scalar_select %p242, %s241, 63
        %s244 = smul.addr %s243, 4
        %s245 = scalar_lea.vmem %s4, %s244
        %s246 = smul.u32 32, %s17
        %v247 = vld [vmem:[%s239] sm:$0xff]
        %v248 = vld [vmem:[%s239 + $0x8] sm:$0xff]
        %v249 = vld [vmem:[%s239 + $0x10] sm:$0xff]
        %v250 = vld [vmem:[%s239 + $0x18] sm:$0xff]
        %v251 = vld [vmem:[%s239 + $0x20] sm:$0xff]
        %v252 = vld [vmem:[%s239 + $0x28] sm:$0xff]
        %v253 = vld [vmem:[%s239 + $0x30] sm:$0xff]
        %v254 = vld [vmem:[%s239 + $0x38] sm:$0xff]
        %v255 = vld [vmem:[%s239 + $0x40] sm:$0xff]
        %v256 = vld [vmem:[%s239 + $0x48] sm:$0xff]
        %v257 = vld [vmem:[%s239 + $0x50] sm:$0xff]
        %v258 = vld [vmem:[%s239 + $0x58] sm:$0xff]
        %v259 = vld [vmem:[%s239 + $0x60] sm:$0xff]
        %v260 = vld [vmem:[%s239 + $0x68] sm:$0xff]
        %v261 = vld [vmem:[%s239 + $0x70] sm:$0xff]
        %v262 = vld [vmem:[%s239 + $0x78] sm:$0xff]
        %v263 = vld [vmem:[%s239 + $0x80] sm:$0xff]
        %v264 = vld [vmem:[%s239 + $0x88] sm:$0xff]
        %v265 = vld [vmem:[%s239 + $0x90] sm:$0xff]
        %v266 = vld [vmem:[%s239 + $0x98] sm:$0xff]
        %v267 = vld [vmem:[%s239 + $0xa0] sm:$0xff]
        %v268 = vld [vmem:[%s239 + $0xa8] sm:$0xff]
        %v269 = vld [vmem:[%s239 + $0xb0] sm:$0xff]
        %v270 = vld [vmem:[%s239 + $0xb8] sm:$0xff]
        %v271 = vld [vmem:[%s239 + $0xc0] sm:$0xff]
        %v272 = vld [vmem:[%s239 + $0xc8] sm:$0xff]
        %v273 = vld [vmem:[%s239 + $0xd0] sm:$0xff]
        %v274 = vld [vmem:[%s239 + $0xd8] sm:$0xff]
        %v275 = vld [vmem:[%s239 + $0xe0] sm:$0xff]
        %v276 = vld [vmem:[%s239 + $0xe8] sm:$0xff]
        %v277 = vld [vmem:[%s239 + $0xf0] sm:$0xff]
        %v278 = vld [vmem:[%s239 + $0xf8] sm:$0xff]
        %v279 = vpack.c.bf16 %v248, %v247
        %v280 = vpack.c.bf16 %v250, %v249
        %v281 = vpack.c.bf16 %v252, %v251
        %v282 = vpack.c.bf16 %v254, %v253
        %v283 = vpack.c.bf16 %v256, %v255
        %v284 = vpack.c.bf16 %v258, %v257
        %v285 = vpack.c.bf16 %v260, %v259
        %v286 = vpack.c.bf16 %v262, %v261
        %v287 = vpack.c.bf16 %v264, %v263
        %v288 = vpack.c.bf16 %v266, %v265
        %v289 = vpack.c.bf16 %v268, %v267
        %v290 = vpack.c.bf16 %v270, %v269
        %v291 = vpack.c.bf16 %v272, %v271
        %v292 = vpack.c.bf16 %v274, %v273
        %v293 = vpack.c.bf16 %v276, %v275
        %v294 = vpack.c.bf16 %v278, %v277
        %v295 = vld [vmem:[#allocation2] sm:$0xf]
        %v296 = vld [vmem:[#allocation2 + $0x4] sm:$0xf]
        %v297 = vld [vmem:[#allocation2 + $0x8] sm:$0xf]
        %v298 = vld [vmem:[#allocation2 + $0xc] sm:$0xf]
        %v299 = vld [vmem:[#allocation2 + $0x10] sm:$0xf]
        %v300 = vld [vmem:[#allocation2 + $0x14] sm:$0xf]
        %v301 = vld [vmem:[#allocation2 + $0x18] sm:$0xf]
        %v302 = vld [vmem:[#allocation2 + $0x1c] sm:$0xf]
        %v303 = vld [vmem:[#allocation2 + $0x20] sm:$0xf]
        %v304 = vld [vmem:[#allocation2 + $0x24] sm:$0xf]
        %v305 = vld [vmem:[#allocation2 + $0x28] sm:$0xf]
        %v306 = vld [vmem:[#allocation2 + $0x2c] sm:$0xf]
        %v307 = vld [vmem:[#allocation2 + $0x30] sm:$0xf]
        %v308 = vld [vmem:[#allocation2 + $0x34] sm:$0xf]
        %v309 = vld [vmem:[#allocation2 + $0x38] sm:$0xf]
        %v310 = vld [vmem:[#allocation2 + $0x3c] sm:$0xf]
        %v327 = vunpack.c.l.b16 %v295
        %v328 = vunpack.c.l.b16 %v296
        %v329 = vunpack.c.l.b16 %v297
        %v330 = vunpack.c.l.b16 %v298
        %v331 = vunpack.c.l.b16 %v299
        %v332 = vunpack.c.l.b16 %v300
        %v333 = vunpack.c.l.b16 %v301
        %v334 = vunpack.c.l.b16 %v302
        %v335 = vunpack.c.l.b16 %v303
        %v336 = vunpack.c.l.b16 %v304
        %v337 = vunpack.c.l.b16 %v305
        %v338 = vunpack.c.l.b16 %v306
        %v339 = vunpack.c.l.b16 %v307
        %v340 = vunpack.c.l.b16 %v308
        %v341 = vunpack.c.l.b16 %v309
        %v342 = vunpack.c.l.b16 %v310
        %v343 = vpack.c.b16 %v328, %v327
        %v344 = vpack.c.b16 %v330, %v329
        %v345 = vpack.c.b16 %v332, %v331
        %v346 = vpack.c.b16 %v334, %v333
        %v347 = vpack.c.b16 %v336, %v335
        %v348 = vpack.c.b16 %v338, %v337
        %v349 = vpack.c.b16 %v340, %v339
        %v350 = vpack.c.b16 %v342, %v341
        %359 = vmatpush.bf16.msra.mxu0 %v350
        %360 = vmatpush.bf16.msra.mxu0 %v349
        %361 = vmatpush.bf16.msra.mxu0 %v348
        %362 = vmatpush.bf16.msra.mxu0 %v347
        %363 = vmatpush.bf16.msra.mxu0 %v346
        %364 = vmatpush.bf16.msra.mxu0 %v345
        %365 = vmatpush.bf16.msra.mxu0 %v344
        %366 = vmatpush.bf16.msra.mxu0 %v343
        %367 = vmatmul.bf16.gmra.mxu0 %v279
        %v368 = vpop.f32.mrf.mxu0
        %v369 = vadd.f32 0.0, %v368
        %v370 = vpop.f32.mrf.mxu0
        %v371 = vadd.f32 0.0, %v370
        %372 = vmatmul.bf16.gmra.mxu0 %v280
        %v373 = vpop.f32.mrf.mxu0
        %v374 = vadd.f32 0.0, %v373
        %v375 = vpop.f32.mrf.mxu0
        %v376 = vadd.f32 0.0, %v375
        %377 = vmatmul.bf16.gmra.mxu0 %v281
        %v378 = vpop.f32.mrf.mxu0
        %v379 = vadd.f32 0.0, %v378
        %v380 = vpop.f32.mrf.mxu0
        %v381 = vadd.f32 0.0, %v380
        %382 = vmatmul.bf16.gmra.mxu0 %v282
        %v383 = vpop.f32.mrf.mxu0
        %v384 = vadd.f32 0.0, %v383
        %v385 = vpop.f32.mrf.mxu0
        %v386 = vadd.f32 0.0, %v385
        %387 = vmatmul.bf16.gmra.mxu0 %v283
        %v388 = vpop.f32.mrf.mxu0
        %v389 = vadd.f32 0.0, %v388
        %v390 = vpop.f32.mrf.mxu0
        %v391 = vadd.f32 0.0, %v390
        %392 = vmatmul.bf16.gmra.mxu0 %v284
        %v393 = vpop.f32.mrf.mxu0
        %v394 = vadd.f32 0.0, %v393
        %v395 = vpop.f32.mrf.mxu0
        %v396 = vadd.f32 0.0, %v395
        %397 = vmatmul.bf16.gmra.mxu0 %v285
        %v398 = vpop.f32.mrf.mxu0
        %v399 = vadd.f32 0.0, %v398
        %v400 = vpop.f32.mrf.mxu0
        %v401 = vadd.f32 0.0, %v400
        %402 = vmatmul.bf16.gmra.mxu0 %v286
        %v403 = vpop.f32.mrf.mxu0
        %v404 = vadd.f32 0.0, %v403
        %v405 = vpop.f32.mrf.mxu0
        %v406 = vadd.f32 0.0, %v405
        %407 = vmatmul.bf16.gmra.mxu0 %v287
        %v408 = vpop.f32.mrf.mxu0
        %v409 = vadd.f32 0.0, %v408
        %v410 = vpop.f32.mrf.mxu0
        %v411 = vadd.f32 0.0, %v410
        %412 = vmatmul.bf16.gmra.mxu0 %v288
        %v413 = vpop.f32.mrf.mxu0
        %v414 = vadd.f32 0.0, %v413
        %v415 = vpop.f32.mrf.mxu0
        %v416 = vadd.f32 0.0, %v415
        %417 = vmatmul.bf16.gmra.mxu0 %v289
        %v418 = vpop.f32.mrf.mxu0
        %v419 = vadd.f32 0.0, %v418
        %v420 = vpop.f32.mrf.mxu0
        %v421 = vadd.f32 0.0, %v420
        %422 = vmatmul.bf16.gmra.mxu0 %v290
        %v423 = vpop.f32.mrf.mxu0
        %v424 = vadd.f32 0.0, %v423
        %v425 = vpop.f32.mrf.mxu0
        %v426 = vadd.f32 0.0, %v425
        %427 = vmatmul.bf16.gmra.mxu0 %v291
        %v428 = vpop.f32.mrf.mxu0
        %v429 = vadd.f32 0.0, %v428
        %v430 = vpop.f32.mrf.mxu0
        %v431 = vadd.f32 0.0, %v430
        %432 = vmatmul.bf16.gmra.mxu0 %v292
        %v433 = vpop.f32.mrf.mxu0
        %v434 = vadd.f32 0.0, %v433
        %v435 = vpop.f32.mrf.mxu0
        %v436 = vadd.f32 0.0, %v435
        %437 = vmatmul.bf16.gmra.mxu0 %v293
        %v438 = vpop.f32.mrf.mxu0
        %v439 = vadd.f32 0.0, %v438
        %v440 = vpop.f32.mrf.mxu0
        %v441 = vadd.f32 0.0, %v440
        %442 = vmatmul.bf16.gmra.mxu0 %v294
        %v443 = vpop.f32.mrf.mxu0
        %v444 = vadd.f32 0.0, %v443
        %v445 = vpop.f32.mrf.mxu0
        %v446 = vadd.f32 0.0, %v445
        %447 = vdwg.mxu0
        %v448 = vld [vmem:[#allocation4] sm:$0x1]
        %v450 = vperm.slane %v448, 0
        %v452 = vmul.f32 %v369, %v450
        %v453 = vmul.f32 %v371, %v450
        %v454 = vmul.f32 %v374, %v450
        %v455 = vmul.f32 %v376, %v450
        %v456 = vmul.f32 %v379, %v450
        %v457 = vmul.f32 %v381, %v450
        %v458 = vmul.f32 %v384, %v450
        %v459 = vmul.f32 %v386, %v450
        %v460 = vmul.f32 %v389, %v450
        %v461 = vmul.f32 %v391, %v450
        %v462 = vmul.f32 %v394, %v450
        %v463 = vmul.f32 %v396, %v450
        %v464 = vmul.f32 %v399, %v450
        %v465 = vmul.f32 %v401, %v450
        %v466 = vmul.f32 %v404, %v450
        %v467 = vmul.f32 %v406, %v450
        %v468 = vmul.f32 %v409, %v450
        %v469 = vmul.f32 %v411, %v450
        %v470 = vmul.f32 %v414, %v450
        %v471 = vmul.f32 %v416, %v450
        %v472 = vmul.f32 %v419, %v450
        %v473 = vmul.f32 %v421, %v450
        %v474 = vmul.f32 %v424, %v450
        %v475 = vmul.f32 %v426, %v450
        %v476 = vmul.f32 %v429, %v450
        %v477 = vmul.f32 %v431, %v450
        %v478 = vmul.f32 %v434, %v450
        %v479 = vmul.f32 %v436, %v450
        %v480 = vmul.f32 %v439, %v450
        %v481 = vmul.f32 %v441, %v450
        %v482 = vmul.f32 %v444, %v450
        %v483 = vmul.f32 %v446, %v450
        %v484 = vld [vmem:[#allocation6] sm:$0x1]
        %v486 = vperm.slane %v484, 0
        %v488 = vadd.f32 %v452, %v486
        %v489 = vadd.f32 %v453, %v486
        %v490 = vadd.f32 %v454, %v486
        %v491 = vadd.f32 %v455, %v486
        %v492 = vadd.f32 %v456, %v486
        %v493 = vadd.f32 %v457, %v486
        %v494 = vadd.f32 %v458, %v486
        %v495 = vadd.f32 %v459, %v486
        %v496 = vadd.f32 %v460, %v486
        %v497 = vadd.f32 %v461, %v486
        %v498 = vadd.f32 %v462, %v486
        %v499 = vadd.f32 %v463, %v486
        %v500 = vadd.f32 %v464, %v486
        %v501 = vadd.f32 %v465, %v486
        %v502 = vadd.f32 %v466, %v486
        %v503 = vadd.f32 %v467, %v486
        %v504 = vadd.f32 %v468, %v486
        %v505 = vadd.f32 %v469, %v486
        %v506 = vadd.f32 %v470, %v486
        %v507 = vadd.f32 %v471, %v486
        %v508 = vadd.f32 %v472, %v486
        %v509 = vadd.f32 %v473, %v486
        %v510 = vadd.f32 %v474, %v486
        %v511 = vadd.f32 %v475, %v486
        %v512 = vadd.f32 %v476, %v486
        %v513 = vadd.f32 %v477, %v486
        %v514 = vadd.f32 %v478, %v486
        %v515 = vadd.f32 %v479, %v486
        %v516 = vadd.f32 %v480, %v486
        %v517 = vadd.f32 %v481, %v486
        %v518 = vadd.f32 %v482, %v486
        %v519 = vadd.f32 %v483, %v486
        %v520 = vmax.f32 %v488, 0.0
        %v521 = vmax.f32 %v489, 0.0
        %v522 = vmax.f32 %v490, 0.0
        %v523 = vmax.f32 %v491, 0.0
        %v524 = vmax.f32 %v492, 0.0
        %v525 = vmax.f32 %v493, 0.0
        %v526 = vmax.f32 %v494, 0.0
        %v527 = vmax.f32 %v495, 0.0
        %v528 = vmax.f32 %v496, 0.0
        %v529 = vmax.f32 %v497, 0.0
        %v530 = vmax.f32 %v498, 0.0
        %v531 = vmax.f32 %v499, 0.0
        %v532 = vmax.f32 %v500, 0.0
        %v533 = vmax.f32 %v501, 0.0
        %v534 = vmax.f32 %v502, 0.0
        %v535 = vmax.f32 %v503, 0.0
        %v536 = vmax.f32 %v504, 0.0
        %v537 = vmax.f32 %v505, 0.0
        %v538 = vmax.f32 %v506, 0.0
        %v539 = vmax.f32 %v507, 0.0
        %v540 = vmax.f32 %v508, 0.0
        %v541 = vmax.f32 %v509, 0.0
        %v542 = vmax.f32 %v510, 0.0
        %v543 = vmax.f32 %v511, 0.0
        %v544 = vmax.f32 %v512, 0.0
        %v545 = vmax.f32 %v513, 0.0
        %v546 = vmax.f32 %v514, 0.0
        %v547 = vmax.f32 %v515, 0.0
        %v548 = vmax.f32 %v516, 0.0
        %v549 = vmax.f32 %v517, 0.0
        %v550 = vmax.f32 %v518, 0.0
        %v551 = vmax.f32 %v519, 0.0
        %v552 = vpack.c.bf16 %v520, %v520
        %v553 = vpack.c.bf16 %v521, %v521
        %v554 = vpack.c.bf16 %v522, %v522
        %v555 = vpack.c.bf16 %v523, %v523
        %v556 = vpack.c.bf16 %v524, %v524
        %v557 = vpack.c.bf16 %v525, %v525
        %v558 = vpack.c.bf16 %v526, %v526
        %v559 = vpack.c.bf16 %v527, %v527
        %v560 = vpack.c.bf16 %v528, %v528
        %v561 = vpack.c.bf16 %v529, %v529
        %v562 = vpack.c.bf16 %v530, %v530
        %v563 = vpack.c.bf16 %v531, %v531
        %v564 = vpack.c.bf16 %v532, %v532
        %v565 = vpack.c.bf16 %v533, %v533
        %v566 = vpack.c.bf16 %v534, %v534
        %v567 = vpack.c.bf16 %v535, %v535
        %v568 = vpack.c.bf16 %v536, %v536
        %v569 = vpack.c.bf16 %v537, %v537
        %v570 = vpack.c.bf16 %v538, %v538
        %v571 = vpack.c.bf16 %v539, %v539
        %v572 = vpack.c.bf16 %v540, %v540
        %v573 = vpack.c.bf16 %v541, %v541
        %v574 = vpack.c.bf16 %v542, %v542
        %v575 = vpack.c.bf16 %v543, %v543
        %v576 = vpack.c.bf16 %v544, %v544
        %v577 = vpack.c.bf16 %v545, %v545
        %v578 = vpack.c.bf16 %v546, %v546
        %v579 = vpack.c.bf16 %v547, %v547
        %v580 = vpack.c.bf16 %v548, %v548
        %v581 = vpack.c.bf16 %v549, %v549
        %v582 = vpack.c.bf16 %v550, %v550
        %v583 = vpack.c.bf16 %v551, %v551
        %584 = vst [vmem:[%s245] sm:$0xf] %v552
        %585 = vst [vmem:[%s245 + $0x4] sm:$0xf] %v553
        %586 = vst [vmem:[%s245 + $0x8] sm:$0xf] %v554
        %587 = vst [vmem:[%s245 + $0xc] sm:$0xf] %v555
        %588 = vst [vmem:[%s245 + $0x10] sm:$0xf] %v556
        %589 = vst [vmem:[%s245 + $0x14] sm:$0xf] %v557
        %590 = vst [vmem:[%s245 + $0x18] sm:$0xf] %v558
        %591 = vst [vmem:[%s245 + $0x1c] sm:$0xf] %v559
        %592 = vst [vmem:[%s245 + $0x20] sm:$0xf] %v560
        %593 = vst [vmem:[%s245 + $0x24] sm:$0xf] %v561
        %594 = vst [vmem:[%s245 + $0x28] sm:$0xf] %v562
        %595 = vst [vmem:[%s245 + $0x2c] sm:$0xf] %v563
        %596 = vst [vmem:[%s245 + $0x30] sm:$0xf] %v564
        %597 = vst [vmem:[%s245 + $0x34] sm:$0xf] %v565
        %598 = vst [vmem:[%s245 + $0x38] sm:$0xf] %v566
        %599 = vst [vmem:[%s245 + $0x3c] sm:$0xf] %v567
        %600 = vst [vmem:[%s245 + $0x40] sm:$0xf] %v568
        %601 = vst [vmem:[%s245 + $0x44] sm:$0xf] %v569
        %602 = vst [vmem:[%s245 + $0x48] sm:$0xf] %v570
        %603 = vst [vmem:[%s245 + $0x4c] sm:$0xf] %v571
        %604 = vst [vmem:[%s245 + $0x50] sm:$0xf] %v572
        %605 = vst [vmem:[%s245 + $0x54] sm:$0xf] %v573
        %606 = vst [vmem:[%s245 + $0x58] sm:$0xf] %v574
        %607 = vst [vmem:[%s245 + $0x5c] sm:$0xf] %v575
        %608 = vst [vmem:[%s245 + $0x60] sm:$0xf] %v576
        %609 = vst [vmem:[%s245 + $0x64] sm:$0xf] %v577
        %610 = vst [vmem:[%s245 + $0x68] sm:$0xf] %v578
        %611 = vst [vmem:[%s245 + $0x6c] sm:$0xf] %v579
        %612 = vst [vmem:[%s245 + $0x70] sm:$0xf] %v580
        %613 = vst [vmem:[%s245 + $0x74] sm:$0xf] %v581
        %614 = vst [vmem:[%s245 + $0x78] sm:$0xf] %v582
        %615 = vst [vmem:[%s245 + $0x7c] sm:$0xf] %v583
        %s616 = smul.u32 32, %s17
        %p617 = scmp.lt.s32.totalorder %s616, 63
        %s618 = scalar_select %p617, %s616, 63
        %s619 = smul.addr %s618, 4
        %s620 = scalar_lea.vmem %s4, %s619
        // Predicated region
        $region49: #{_lambda_.2} parent=35 // pred_check
          %p621 = pneg %p124
        $region50: #{_lambda_.2} parent=35 // pred_check_branch
          %623 = sbr.rel (%p621) target = $region52
        $region51: #{_lambda_.2} parent=35 // pred_region
          %s624 = smul.u32 32, %s17
        $region52: #{_lambda_.2} parent=35 // pred_fallthru
          _
      $region36: #{_lambda_.2} parent=5 // pred_fallthru
        _
      %p625 = scmp.le.s32.totalorder 2, %s12
      // Predicated region
      $region53: #{_lambda_.2} parent=5 // pred_check
        %p626 = pneg %p625
      $region54: #{_lambda_.2} parent=5 // pred_check_branch
        %628 = sbr.rel (%p626) target = $region56
      $region55: #{_lambda_.2} parent=5 // pred_region
        %s629 = ssub.s32 %s12, 2
        // Predicated region
        $region57: #{_lambda_.2} parent=55 // pred_check
          %p630 = pneg %p130
        $region58: #{_lambda_.2} parent=55 // pred_check_branch
          %632 = sbr.rel (%p630) target = $region60
        $region59: #{_lambda_.2} parent=55 // pred_region
          %s633 = smul.u32 32, %s18
          %p634 = scmp.lt.s32.totalorder %s633, 63
          %s635 = scalar_select %p634, %s633, 63
          %s636 = smul.addr %s635, 4
          %s637 = scalar_lea.vmem %s4, %s636
        $region60: #{_lambda_.2} parent=55 // pred_fallthru
          _
      $region56: #{_lambda_.2} parent=5 // pred_fallthru
        _
    $region6: #{_lambda_.2} parent=1 // loop_footer
      %s16 = sadd.s32 1, %s12
    $region7: #{_lambda_.2} parent=1 // loop_footer_branch
      %11 = sbr.rel target = $region3
    $region8: #{_lambda_.2} parent=1 // loop_exit
      _
    %638 = vsyncpa [#allocation3], 1
    %s639 = scalar_lea.sflag [#allocation3], 1
    %640 = vsyncpa %s639, 1
    %641 = vsyncpa [#allocation5], 1

// kernel: _lambda_.3
$region0: #{_lambda_.3}
  #allocation0 [shape = 'u32[]', space=smem, size = 0x4, offset = 0x4, fixed_abs, tag = 'smem constant byte address 0x4 - core index']
  #allocation1 [shape = 'u32[72,128]{1,0:T(1,128)}', space=vmem, size = 0x9000, scoped, tag = 'internal scratch']
  %s0 = inlined_call_operand.vmem [shape: bf16[128,1152], index: 0, kind: input, shape index: {}]
  %s1 = inlined_call_operand.vmem [shape: f32[128,128], index: 1, kind: input, shape index: {}]
  %s2 = inlined_call_operand.vmem [shape: bf16[1152,128], index: 2, kind: input, shape index: {}]
  %s3 = inlined_call_operand.vmem [shape: f32[1,128], index: 3, kind: input, shape index: {}]
  %s4 = inlined_call_operand.vmem [shape: f32[1,128], index: 4, kind: input, shape index: {}]
  %s5 = inlined_call_operand.vmem [shape: bf16[128,128], index: 5, kind: input, shape index: {}]
  %s6 = inlined_call_operand.vmem [shape: f32[1,128], index: 6, kind: input, shape index: {}]
  %s7 = inlined_call_operand.vmem [shape: f32[1,128], index: 7, kind: input, shape index: {}]
  %s8 = inlined_call_operand.vmem [shape: bf16[128,128], index: 8, kind: input, shape index: {}]
  %s9 = inlined_call_operand.vmem [shape: f32[1,128], index: 9, kind: input, shape index: {}]
  %s10 = inlined_call_operand.vmem [shape: f32[1,128], index: 10, kind: input, shape index: {}]
  %s11 = inlined_call_operand.hbm [shape: f32[128,128], index: 11, kind: output, shape index: {}]
  %s12 = sld [smem:[#allocation0]]
  $region77: #{_lambda_.3} parent=0
    _
  %s14 = ssub.s32 1, %s12
  %s15 = scalar_select 0, %s14, %s12
  $region1: #{_lambda_.3} parent=0
    #allocation2 [shape = 'u8[65536]{0}', space=vmem, size = 0x10000, scoped, tag = 'output window, operand 0']
    #allocation3 [shape = 's32[2]{0}', space=sflag, size = 0x8, scoped, tag = 'scoped memory for _lambda_.3']
    %16 = vsyncpa [#allocation3], 0
    %s17 = scalar_lea.sflag [#allocation3], 1
    %18 = vsyncpa %s17, 0
    loop: start=0, step=1, limit=4
    $region2: #{_lambda_.3} parent=1 // loop_pre_header
      _
    $region3: #{_lambda_.3} parent=1 // loop_header
      %s20 = sphi 0, %s24
      %p21 = scmp.ge.s32.totalorder %s20, 4
      %s30 = sphi 0, %s32
      %s33 = sphi 0, %s30
      %s34 = sphi 0, %s33
      %s50 = sphi 0, %s34
      %s56 = sphi 0, %s58
      %s59 = sphi 0, %s56
      %s60 = sphi 0, %s59
      %s76 = sphi 0, %s60
      %s80 = sphi 0, %s80
      %s82 = sphi 0, %s80
      %s83 = sphi 0, %s82
      %s97 = sphi 0, %s83
      %s101 = sphi 0, %s101
      %s103 = sphi 0, %s101
      %s104 = sphi 0, %s103
      %s118 = sphi 0, %s104
      %s122 = sphi 0, %s122
      %s124 = sphi 0, %s122
      %s125 = sphi 0, %s124
      %s139 = sphi 0, %s125
      %s143 = sphi 0, %s143
      %s145 = sphi 0, %s143
      %s146 = sphi 0, %s145
      %s160 = sphi 0, %s146
      %s164 = sphi 0, %s164
      %s166 = sphi 0, %s164
      %s167 = sphi 0, %s166
      %s181 = sphi 0, %s167
      %s185 = sphi 0, %s185
      %s187 = sphi 0, %s185
      %s188 = sphi 0, %s187
      %s202 = sphi 0, %s188
      %s206 = sphi 0, %s206
      %s208 = sphi 0, %s206
      %s209 = sphi 0, %s208
      %s223 = sphi 0, %s209
      %s227 = sphi 0, %s227
      %s229 = sphi 0, %s227
      %s230 = sphi 0, %s229
      %s244 = sphi 0, %s230
      %s248 = sphi 0, %s248
      %s250 = sphi 0, %s248
      %s251 = sphi 0, %s250
      %s265 = sphi 0, %s251
      %s271 = sphi 0, %s273
      %s274 = sphi 0, %s271
      %s275 = sphi 0, %s274
      %s291 = sphi 0, %s275
    $region4: #{_lambda_.3} parent=1 // loop_header_branch
      %23 = sbr.rel (%p21) target = $region8
    $region5: #{_lambda_.3} parent=1 // loop_body
      %s25 = ssub.s32 %s20, 1
      %s26 = ssub.s32 %s20, 2
      %s27 = sadd.s32 %s20, 1
      %s28 = ssub.s32 %s20, %s27
      %p29 = scmp.eq.s32.totalorder %s28, 0
      %s31 = sadd.s32 %s30, 1
      %s32 = scalar_select %p29, %s30, %s31
      %p35 = pneg %p29
      %p36 = scmp.eq.s32.totalorder %s20, 1
      %p37 = por %p35, %p36
      %p38 = scmp.ne.s32.totalorder %s30, %s33
      %p39 = scmp.eq.s32.totalorder %s20, 0
      %p40 = por %p38, %p39
      %p41 = scmp.ne.s32.totalorder %s30, %s33
      %p42 = scmp.eq.s32.totalorder %s25, 1
      %p43 = por %p41, %p42
      %p44 = scmp.ne.s32.totalorder %s33, %s34
      %p45 = scmp.eq.s32.totalorder %s25, 0
      %p46 = por %p44, %p45
      %p47 = scmp.ne.s32.totalorder %s33, %s34
      %p48 = scmp.eq.s32.totalorder %s26, 1
      %p49 = por %p47, %p48
      %p51 = scmp.ne.s32.totalorder %s34, %s50
      %p52 = scmp.eq.s32.totalorder %s26, 0
      %p53 = por %p51, %p52
      %s54 = ssub.s32 %s20, %s27
      %p55 = scmp.eq.s32.totalorder %s54, 0
      %s57 = sadd.s32 %s56, 1
      %s58 = scalar_select %p55, %s56, %s57
      %p61 = pneg %p55
      %p62 = scmp.eq.s32.totalorder %s20, 1
      %p63 = por %p61, %p62
      %p64 = scmp.ne.s32.totalorder %s56, %s59
      %p65 = scmp.eq.s32.totalorder %s20, 0
      %p66 = por %p64, %p65
      %p67 = scmp.ne.s32.totalorder %s56, %s59
      %p68 = scmp.eq.s32.totalorder %s25, 1
      %p69 = por %p67, %p68
      %p70 = scmp.ne.s32.totalorder %s59, %s60
      %p71 = scmp.eq.s32.totalorder %s25, 0
      %p72 = por %p70, %p71
      %p73 = scmp.ne.s32.totalorder %s59, %s60
      %p74 = scmp.eq.s32.totalorder %s26, 1
      %p75 = por %p73, %p74
      %p77 = scmp.ne.s32.totalorder %s60, %s76
      %p78 = scmp.eq.s32.totalorder %s26, 0
      %p79 = por %p77, %p78
      %s81 = sadd.s32 %s80, 1
      %p84 = scmp.eq.s32.totalorder %s20, 1
      %p85 = scmp.ne.s32.totalorder %s80, %s82
      %p86 = scmp.eq.s32.totalorder %s20, 0
      %p87 = por %p85, %p86
      %p88 = scmp.ne.s32.totalorder %s80, %s82
      %p89 = scmp.eq.s32.totalorder %s25, 1
      %p90 = por %p88, %p89
      %p91 = scmp.ne.s32.totalorder %s82, %s83
      %p92 = scmp.eq.s32.totalorder %s25, 0
      %p93 = por %p91, %p92
      %p94 = scmp.ne.s32.totalorder %s82, %s83
      %p95 = scmp.eq.s32.totalorder %s26, 1
      %p96 = por %p94, %p95
      %p98 = scmp.ne.s32.totalorder %s83, %s97
      %p99 = scmp.eq.s32.totalorder %s26, 0
      %p100 = por %p98, %p99
      %s102 = sadd.s32 %s101, 1
      %p105 = scmp.eq.s32.totalorder %s20, 1
      %p106 = scmp.ne.s32.totalorder %s101, %s103
      %p107 = scmp.eq.s32.totalorder %s20, 0
      %p108 = por %p106, %p107
      %p109 = scmp.ne.s32.totalorder %s101, %s103
      %p110 = scmp.eq.s32.totalorder %s25, 1
      %p111 = por %p109, %p110
      %p112 = scmp.ne.s32.totalorder %s103, %s104
      %p113 = scmp.eq.s32.totalorder %s25, 0
      %p114 = por %p112, %p113
      %p115 = scmp.ne.s32.totalorder %s103, %s104
      %p116 = scmp.eq.s32.totalorder %s26, 1
      %p117 = por %p115, %p116
      %p119 = scmp.ne.s32.totalorder %s104, %s118
      %p120 = scmp.eq.s32.totalorder %s26, 0
      %p121 = por %p119, %p120
      %s123 = sadd.s32 %s122, 1
      %p126 = scmp.eq.s32.totalorder %s20, 1
      %p127 = scmp.ne.s32.totalorder %s122, %s124
      %p128 = scmp.eq.s32.totalorder %s20, 0
      %p129 = por %p127, %p128
      %p130 = scmp.ne.s32.totalorder %s122, %s124
      %p131 = scmp.eq.s32.totalorder %s25, 1
      %p132 = por %p130, %p131
      %p133 = scmp.ne.s32.totalorder %s124, %s125
      %p134 = scmp.eq.s32.totalorder %s25, 0
      %p135 = por %p133, %p134
      %p136 = scmp.ne.s32.totalorder %s124, %s125
      %p137 = scmp.eq.s32.totalorder %s26, 1
      %p138 = por %p136, %p137
      %p140 = scmp.ne.s32.totalorder %s125, %s139
      %p141 = scmp.eq.s32.totalorder %s26, 0
      %p142 = por %p140, %p141
      %s144 = sadd.s32 %s143, 1
      %p147 = scmp.eq.s32.totalorder %s20, 1
      %p148 = scmp.ne.s32.totalorder %s143, %s145
      %p149 = scmp.eq.s32.totalorder %s20, 0
      %p150 = por %p148, %p149
      %p151 = scmp.ne.s32.totalorder %s143, %s145
      %p152 = scmp.eq.s32.totalorder %s25, 1
      %p153 = por %p151, %p152
      %p154 = scmp.ne.s32.totalorder %s145, %s146
      %p155 = scmp.eq.s32.totalorder %s25, 0
      %p156 = por %p154, %p155
      %p157 = scmp.ne.s32.totalorder %s145, %s146
      %p158 = scmp.eq.s32.totalorder %s26, 1
      %p159 = por %p157, %p158
      %p161 = scmp.ne.s32.totalorder %s146, %s160
      %p162 = scmp.eq.s32.totalorder %s26, 0
      %p163 = por %p161, %p162
      %s165 = sadd.s32 %s164, 1
      %p168 = scmp.eq.s32.totalorder %s20, 1
      %p169 = scmp.ne.s32.totalorder %s164, %s166
      %p170 = scmp.eq.s32.totalorder %s20, 0
      %p171 = por %p169, %p170
      %p172 = scmp.ne.s32.totalorder %s164, %s166
      %p173 = scmp.eq.s32.totalorder %s25, 1
      %p174 = por %p172, %p173
      %p175 = scmp.ne.s32.totalorder %s166, %s167
      %p176 = scmp.eq.s32.totalorder %s25, 0
      %p177 = por %p175, %p176
      %p178 = scmp.ne.s32.totalorder %s166, %s167
      %p179 = scmp.eq.s32.totalorder %s26, 1
      %p180 = por %p178, %p179
      %p182 = scmp.ne.s32.totalorder %s167, %s181
      %p183 = scmp.eq.s32.totalorder %s26, 0
      %p184 = por %p182, %p183
      %s186 = sadd.s32 %s185, 1
      %p189 = scmp.eq.s32.totalorder %s20, 1
      %p190 = scmp.ne.s32.totalorder %s185, %s187
      %p191 = scmp.eq.s32.totalorder %s20, 0
      %p192 = por %p190, %p191
      %p193 = scmp.ne.s32.totalorder %s185, %s187
      %p194 = scmp.eq.s32.totalorder %s25, 1
      %p195 = por %p193, %p194
      %p196 = scmp.ne.s32.totalorder %s187, %s188
      %p197 = scmp.eq.s32.totalorder %s25, 0
      %p198 = por %p196, %p197
      %p199 = scmp.ne.s32.totalorder %s187, %s188
      %p200 = scmp.eq.s32.totalorder %s26, 1
      %p201 = por %p199, %p200
      %p203 = scmp.ne.s32.totalorder %s188, %s202
      %p204 = scmp.eq.s32.totalorder %s26, 0
      %p205 = por %p203, %p204
      %s207 = sadd.s32 %s206, 1
      %p210 = scmp.eq.s32.totalorder %s20, 1
      %p211 = scmp.ne.s32.totalorder %s206, %s208
      %p212 = scmp.eq.s32.totalorder %s20, 0
      %p213 = por %p211, %p212
      %p214 = scmp.ne.s32.totalorder %s206, %s208
      %p215 = scmp.eq.s32.totalorder %s25, 1
      %p216 = por %p214, %p215
      %p217 = scmp.ne.s32.totalorder %s208, %s209
      %p218 = scmp.eq.s32.totalorder %s25, 0
      %p219 = por %p217, %p218
      %p220 = scmp.ne.s32.totalorder %s208, %s209
      %p221 = scmp.eq.s32.totalorder %s26, 1
      %p222 = por %p220, %p221
      %p224 = scmp.ne.s32.totalorder %s209, %s223
      %p225 = scmp.eq.s32.totalorder %s26, 0
      %p226 = por %p224, %p225
      %s228 = sadd.s32 %s227, 1
      %p231 = scmp.eq.s32.totalorder %s20, 1
      %p232 = scmp.ne.s32.totalorder %s227, %s229
      %p233 = scmp.eq.s32.totalorder %s20, 0
      %p234 = por %p232, %p233
      %p235 = scmp.ne.s32.totalorder %s227, %s229
      %p236 = scmp.eq.s32.totalorder %s25, 1
      %p237 = por %p235, %p236
      %p238 = scmp.ne.s32.totalorder %s229, %s230
      %p239 = scmp.eq.s32.totalorder %s25, 0
      %p240 = por %p238, %p239
      %p241 = scmp.ne.s32.totalorder %s229, %s230
      %p242 = scmp.eq.s32.totalorder %s26, 1
      %p243 = por %p241, %p242
      %p245 = scmp.ne.s32.totalorder %s230, %s244
      %p246 = scmp.eq.s32.totalorder %s26, 0
      %p247 = por %p245, %p246
      %s249 = sadd.s32 %s248, 1
      %p252 = scmp.eq.s32.totalorder %s20, 1
      %p253 = scmp.ne.s32.totalorder %s248, %s250
      %p254 = scmp.eq.s32.totalorder %s20, 0
      %p255 = por %p253, %p254
      %p256 = scmp.ne.s32.totalorder %s248, %s250
      %p257 = scmp.eq.s32.totalorder %s25, 1
      %p258 = por %p256, %p257
      %p259 = scmp.ne.s32.totalorder %s250, %s251
      %p260 = scmp.eq.s32.totalorder %s25, 0
      %p261 = por %p259, %p260
      %p262 = scmp.ne.s32.totalorder %s250, %s251
      %p263 = scmp.eq.s32.totalorder %s26, 1
      %p264 = por %p262, %p263
      %p266 = scmp.ne.s32.totalorder %s251, %s265
      %p267 = scmp.eq.s32.totalorder %s26, 0
      %p268 = por %p266, %p267
      %s269 = ssub.s32 %s20, %s27
      %p270 = scmp.eq.s32.totalorder %s269, 0
      %s272 = sadd.s32 %s271, 1
      %s273 = scalar_select %p270, %s271, %s272
      %p276 = pneg %p270
      %p277 = scmp.eq.s32.totalorder %s20, 1
      %p278 = por %p276, %p277
      %p279 = scmp.ne.s32.totalorder %s271, %s274
      %p280 = scmp.eq.s32.totalorder %s20, 0
      %p281 = por %p279, %p280
      %p282 = scmp.ne.s32.totalorder %s271, %s274
      %p283 = scmp.eq.s32.totalorder %s25, 1
      %p284 = por %p282, %p283
      %p285 = scmp.ne.s32.totalorder %s274, %s275
      %p286 = scmp.eq.s32.totalorder %s25, 0
      %p287 = por %p285, %p286
      %p288 = scmp.ne.s32.totalorder %s274, %s275
      %p289 = scmp.eq.s32.totalorder %s26, 1
      %p290 = por %p288, %p289
      %p292 = scmp.ne.s32.totalorder %s275, %s291
      %p293 = scmp.eq.s32.totalorder %s26, 0
      %p294 = por %p292, %p293
      %p295 = scmp.le.s32.totalorder 1, %s20
      %p296 = scmp.lt.s32.totalorder %s20, 3
      %p297 = pnand %p295, %p296
      %p298 = pneg %p297
      // Predicated region
      $region9: #{_lambda_.3} parent=5 // pred_check
        _
      $region10: #{_lambda_.3} parent=5 // pred_check_branch
        %300 = sbr.rel (%p297) target = $region12
      $region11: #{_lambda_.3} parent=5 // pred_region
        %s301 = ssub.s32 %s20, 1
        // Predicated region
        $region13: #{_lambda_.3} parent=11 // pred_check
          %p302 = pneg %p93
        $region14: #{_lambda_.3} parent=11 // pred_check_branch
          %304 = sbr.rel (%p302) target = $region16
        $region15: #{_lambda_.3} parent=11 // pred_region
          _
        $region16: #{_lambda_.3} parent=11 // pred_fallthru
          _
        // Predicated region
        $region17: #{_lambda_.3} parent=11 // pred_check
          %p305 = pneg %p114
        $region18: #{_lambda_.3} parent=11 // pred_check_branch
          %307 = sbr.rel (%p305) target = $region20
        $region19: #{_lambda_.3} parent=11 // pred_region
          _
        $region20: #{_lambda_.3} parent=11 // pred_fallthru
          _
        // Predicated region
        $region21: #{_lambda_.3} parent=11 // pred_check
          %p308 = pneg %p135
        $region22: #{_lambda_.3} parent=11 // pred_check_branch
          %310 = sbr.rel (%p308) target = $region24
        $region23: #{_lambda_.3} parent=11 // pred_region
          _
        $region24: #{_lambda_.3} parent=11 // pred_fallthru
          _
        // Predicated region
        $region25: #{_lambda_.3} parent=11 // pred_check
          %p311 = pneg %p156
        $region26: #{_lambda_.3} parent=11 // pred_check_branch
          %313 = sbr.rel (%p311) target = $region28
        $region27: #{_lambda_.3} parent=11 // pred_region
          _
        $region28: #{_lambda_.3} parent=11 // pred_fallthru
          _
        // Predicated region
        $region29: #{_lambda_.3} parent=11 // pred_check
          %p314 = pneg %p177
        $region30: #{_lambda_.3} parent=11 // pred_check_branch
          %316 = sbr.rel (%p314) target = $region32
        $region31: #{_lambda_.3} parent=11 // pred_region
          _
        $region32: #{_lambda_.3} parent=11 // pred_fallthru
          _
        // Predicated region
        $region33: #{_lambda_.3} parent=11 // pred_check
          %p317 = pneg %p198
        $region34: #{_lambda_.3} parent=11 // pred_check_branch
          %319 = sbr.rel (%p317) target = $region36
        $region35: #{_lambda_.3} parent=11 // pred_region
          _
        $region36: #{_lambda_.3} parent=11 // pred_fallthru
          _
        // Predicated region
        $region37: #{_lambda_.3} parent=11 // pred_check
          %p320 = pneg %p219
        $region38: #{_lambda_.3} parent=11 // pred_check_branch
          %322 = sbr.rel (%p320) target = $region40
        $region39: #{_lambda_.3} parent=11 // pred_region
          _
        $region40: #{_lambda_.3} parent=11 // pred_fallthru
          _
        // Predicated region
        $region41: #{_lambda_.3} parent=11 // pred_check
          %p323 = pneg %p240
        $region42: #{_lambda_.3} parent=11 // pred_check_branch
          %325 = sbr.rel (%p323) target = $region44
        $region43: #{_lambda_.3} parent=11 // pred_region
          _
        $region44: #{_lambda_.3} parent=11 // pred_fallthru
          _
        // Predicated region
        $region45: #{_lambda_.3} parent=11 // pred_check
          %p326 = pneg %p261
        $region46: #{_lambda_.3} parent=11 // pred_check_branch
          %328 = sbr.rel (%p326) target = $region48
        $region47: #{_lambda_.3} parent=11 // pred_region
          _
        $region48: #{_lambda_.3} parent=11 // pred_fallthru
          _
      $region12: #{_lambda_.3} parent=5 // pred_fallthru
        _
      %p329 = scmp.lt.s32.totalorder %s20, 2
      // Predicated region
      $region49: #{_lambda_.3} parent=5 // pred_check
        %p330 = pneg %p329
      $region50: #{_lambda_.3} parent=5 // pred_check_branch
        %332 = sbr.rel (%p330) target = $region52
      $region51: #{_lambda_.3} parent=5 // pred_region
        // Predicated region
        $region53: #{_lambda_.3} parent=51 // pred_check
          %p333 = pneg %p40
        $region54: #{_lambda_.3} parent=51 // pred_check_branch
          %335 = sbr.rel (%p333) target = $region56
        $region55: #{_lambda_.3} parent=51 // pred_region
          %s336 = smul.u32 8, %s20
          %p337 = scmp.lt.s32.totalorder %s336, 15
          %s338 = scalar_select %p337, %s336, 15
          %s339 = smul.addr %s338, 9
          %s340 = smul.addr %s339, 4
          %s341 = scalar_lea.vmem %s0, %s340
          %s342 = smul.u32 8, %s20
        $region56: #{_lambda_.3} parent=51 // pred_fallthru
          _
        // Predicated region
        $region57: #{_lambda_.3} parent=51 // pred_check
          %p343 = pneg %p66
        $region58: #{_lambda_.3} parent=51 // pred_check_branch
          %345 = sbr.rel (%p343) target = $region60
        $region59: #{_lambda_.3} parent=51 // pred_region
          %s346 = smul.u32 8, %s20
          %p347 = scmp.lt.s32.totalorder %s346, 15
          %s348 = scalar_select %p347, %s346, 15
          %s349 = smul.addr %s348, 8
          %s350 = scalar_lea.vmem %s1, %s349
          %s351 = smul.u32 8, %s20
        $region60: #{_lambda_.3} parent=51 // pred_fallthru
          _
      $region52: #{_lambda_.3} parent=5 // pred_fallthru
        _
      %p352 = scmp.le.s32.totalorder 1, %s20
      %p353 = scmp.lt.s32.totalorder %s20, 3
      %p354 = pnand %p352, %p353
      %p355 = pneg %p354
      // Predicated region
      $region61: #{_lambda_.3} parent=5 // pred_check
        _
      $region62: #{_lambda_.3} parent=5 // pred_check_branch
        %357 = sbr.rel (%p354) target = $region64
      $region63: #{_lambda_.3} parent=5 // pred_region
        %s358 = ssub.s32 %s20, 1
        %s359 = smul.u32 8, %s25
        %p360 = scmp.lt.s32.totalorder %s359, 15
        %s361 = scalar_select %p360, %s359, 15
        %s362 = smul.addr %s361, 9
        %s363 = smul.addr %s362, 4
        %s364 = scalar_lea.vmem %s0, %s363
        %p365 = pneg %p46
        %p366 = pneg %p43
        %s367 = smul.u32 8, %s25
        %p368 = scmp.lt.s32.totalorder %s367, 15
        %s369 = scalar_select %p368, %s367, 15
        %s370 = smul.addr %s369, 8
        %s371 = scalar_lea.vmem %s1, %s370
        %p372 = pneg %p72
        %p373 = pneg %p69
        %p374 = pneg %p93
        %p375 = pneg %p90
        %p376 = pneg %p114
        %p377 = pneg %p111
        %p378 = pneg %p135
        %p379 = pneg %p132
        %p380 = pneg %p156
        %p381 = pneg %p153
        %p382 = pneg %p177
        %p383 = pneg %p174
        %p384 = pneg %p198
        %p385 = pneg %p195
        %p386 = pneg %p219
        %p387 = pneg %p216
        %p388 = pneg %p240
        %p389 = pneg %p237
        %p390 = pneg %p261
        %p391 = pneg %p258
        %p392 = pneg %p287
        %p393 = pneg %p284
        %s394 = sand.u32 %s274, 1
        %s395 = scalar_lea.sflag [#allocation3], %s394
        %s396 = sand.u32 %s274, 1
        %s397 = smul.addr %s396, 64
        %s398 = scalar_lea.vmem [#allocation2], %s397
        %s399 = smul.u32 8, %s25
        %p400 = scmp.lt.s32.totalorder %s399, 15
        %s401 = scalar_select %p400, %s399, 15
        %s402 = smul.addr %s401, 9
        %s403 = smul.addr %s402, 4
        %s404 = scalar_lea.vmem %s0, %s403
        %s405 = smul.u32 8, %s25
        %s406 = smul.u32 8, %s25
        %p407 = scmp.lt.s32.totalorder %s406, 15
        %s408 = scalar_select %p407, %s406, 15
        %s409 = smul.addr %s408, 8
        %s410 = scalar_lea.vmem %s1, %s409
        %s411 = smul.u32 8, %s25
        %s412 = smul.u32 8, %s25
        %v413 = vld [vmem:[%s404] sm:$0xff]
        %v414 = vld [vmem:[%s404 + $0x8] sm:$0xff]
        %v415 = vld [vmem:[%s404 + $0x10] sm:$0xff]
        %v416 = vld [vmem:[%s404 + $0x18] sm:$0xff]
        %v417 = vld [vmem:[%s404 + $0x20] sm:$0xf]
        %v418 = vld [vmem:[%s404 + $0x24] sm:$0xff]
        %v419 = vld [vmem:[%s404 + $0x2c] sm:$0xff]
        %v420 = vld [vmem:[%s404 + $0x34] sm:$0xff]
        %v421 = vld [vmem:[%s404 + $0x3c] sm:$0xff]
        %v422 = vld [vmem:[%s404 + $0x44] sm:$0xf]
        %v423 = vld [vmem:[%s404 + $0x48] sm:$0xff]
        %v424 = vld [vmem:[%s404 + $0x50] sm:$0xff]
        %v425 = vld [vmem:[%s404 + $0x58] sm:$0xff]
        %v426 = vld [vmem:[%s404 + $0x60] sm:$0xff]
        %v427 = vld [vmem:[%s404 + $0x68] sm:$0xf]
        %v428 = vld [vmem:[%s404 + $0x6c] sm:$0xff]
        %v429 = vld [vmem:[%s404 + $0x74] sm:$0xff]
        %v430 = vld [vmem:[%s404 + $0x7c] sm:$0xff]
        %v431 = vld [vmem:[%s404 + $0x84] sm:$0xff]
        %v432 = vld [vmem:[%s404 + $0x8c] sm:$0xf]
        %v433 = vld [vmem:[%s404 + $0x90] sm:$0xff]
        %v434 = vld [vmem:[%s404 + $0x98] sm:$0xff]
        %v435 = vld [vmem:[%s404 + $0xa0] sm:$0xff]
        %v436 = vld [vmem:[%s404 + $0xa8] sm:$0xff]
        %v437 = vld [vmem:[%s404 + $0xb0] sm:$0xf]
        %v438 = vld [vmem:[%s404 + $0xb4] sm:$0xff]
        %v439 = vld [vmem:[%s404 + $0xbc] sm:$0xff]
        %v440 = vld [vmem:[%s404 + $0xc4] sm:$0xff]
        %v441 = vld [vmem:[%s404 + $0xcc] sm:$0xff]
        %v442 = vld [vmem:[%s404 + $0xd4] sm:$0xf]
        %v443 = vld [vmem:[%s404 + $0xd8] sm:$0xff]
        %v444 = vld [vmem:[%s404 + $0xe0] sm:$0xff]
        %v445 = vld [vmem:[%s404 + $0xe8] sm:$0xff]
        %v446 = vld [vmem:[%s404 + $0xf0] sm:$0xff]
        %v447 = vld [vmem:[%s404 + $0xf8] sm:$0xf]
        %v448 = vld [vmem:[%s404 + $0xfc] sm:$0xff]
        %v449 = vld [vmem:[%s404 + $0x104] sm:$0xff]
        %v450 = vld [vmem:[%s404 + $0x10c] sm:$0xff]
        %v451 = vld [vmem:[%s404 + $0x114] sm:$0xff]
        %v452 = vld [vmem:[%s404 + $0x11c] sm:$0xf]
        %v453 = vld [vmem:[%s2] sm:$0xf]
        %v454 = vld [vmem:[%s2 + $0x4] sm:$0xf]
        %v455 = vld [vmem:[%s2 + $0x8] sm:$0xf]
        %v456 = vld [vmem:[%s2 + $0xc] sm:$0xf]
        %v457 = vld [vmem:[%s2 + $0x10] sm:$0xf]
        %v458 = vld [vmem:[%s2 + $0x14] sm:$0xf]
        %v459 = vld [vmem:[%s2 + $0x18] sm:$0xf]
        %v460 = vld [vmem:[%s2 + $0x1c] sm:$0xf]
        %v461 = vld [vmem:[%s2 + $0x20] sm:$0xf]
        %v462 = vld [vmem:[%s2 + $0x24] sm:$0xf]
        %v463 = vld [vmem:[%s2 + $0x28] sm:$0xf]
        %v464 = vld [vmem:[%s2 + $0x2c] sm:$0xf]
        %v465 = vld [vmem:[%s2 + $0x30] sm:$0xf]
        %v466 = vld [vmem:[%s2 + $0x34] sm:$0xf]
        %v467 = vld [vmem:[%s2 + $0x38] sm:$0xf]
        %v468 = vld [vmem:[%s2 + $0x3c] sm:$0xf]
        %v469 = vld [vmem:[%s2 + $0x40] sm:$0xf]
        %v470 = vld [vmem:[%s2 + $0x44] sm:$0xf]
        %v471 = vld [vmem:[%s2 + $0x48] sm:$0xf]
        %v472 = vld [vmem:[%s2 + $0x4c] sm:$0xf]
        %v473 = vld [vmem:[%s2 + $0x50] sm:$0xf]
        %v474 = vld [vmem:[%s2 + $0x54] sm:$0xf]
        %v475 = vld [vmem:[%s2 + $0x58] sm:$0xf]
        %v476 = vld [vmem:[%s2 + $0x5c] sm:$0xf]
        %v477 = vld [vmem:[%s2 + $0x60] sm:$0xf]
        %v478 = vld [vmem:[%s2 + $0x64] sm:$0xf]
        %v479 = vld [vmem:[%s2 + $0x68] sm:$0xf]
        %v480 = vld [vmem:[%s2 + $0x6c] sm:$0xf]
        %v481 = vld [vmem:[%s2 + $0x70] sm:$0xf]
        %v482 = vld [vmem:[%s2 + $0x74] sm:$0xf]
        %v483 = vld [vmem:[%s2 + $0x78] sm:$0xf]
        %v484 = vld [vmem:[%s2 + $0x7c] sm:$0xf]
        %v485 = vld [vmem:[%s2 + $0x80] sm:$0xf]
        %v486 = vld [vmem:[%s2 + $0x84] sm:$0xf]
        %v487 = vld [vmem:[%s2 + $0x88] sm:$0xf]
        %v488 = vld [vmem:[%s2 + $0x8c] sm:$0xf]
        %v489 = vld [vmem:[%s2 + $0x90] sm:$0xf]
        %v490 = vld [vmem:[%s2 + $0x94] sm:$0xf]
        %v491 = vld [vmem:[%s2 + $0x98] sm:$0xf]
        %v492 = vld [vmem:[%s2 + $0x9c] sm:$0xf]
        %v493 = vld [vmem:[%s2 + $0xa0] sm:$0xf]
        %v494 = vld [vmem:[%s2 + $0xa4] sm:$0xf]
        %v495 = vld [vmem:[%s2 + $0xa8] sm:$0xf]
        %v496 = vld [vmem:[%s2 + $0xac] sm:$0xf]
        %v497 = vld [vmem:[%s2 + $0xb0] sm:$0xf]
        %v498 = vld [vmem:[%s2 + $0xb4] sm:$0xf]
        %v499 = vld [vmem:[%s2 + $0xb8] sm:$0xf]
        %v500 = vld [vmem:[%s2 + $0xbc] sm:$0xf]
        %v501 = vld [vmem:[%s2 + $0xc0] sm:$0xf]
        %v502 = vld [vmem:[%s2 + $0xc4] sm:$0xf]
        %v503 = vld [vmem:[%s2 + $0xc8] sm:$0xf]
        %v504 = vld [vmem:[%s2 + $0xcc] sm:$0xf]
        %v505 = vld [vmem:[%s2 + $0xd0] sm:$0xf]
        %v506 = vld [vmem:[%s2 + $0xd4] sm:$0xf]
        %v507 = vld [vmem:[%s2 + $0xd8] sm:$0xf]
        %v508 = vld [vmem:[%s2 + $0xdc] sm:$0xf]
        %v509 = vld [vmem:[%s2 + $0xe0] sm:$0xf]
        %v510 = vld [vmem:[%s2 + $0xe4] sm:$0xf]
        %v511 = vld [vmem:[%s2 + $0xe8] sm:$0xf]
        %v512 = vld [vmem:[%s2 + $0xec] sm:$0xf]
        %v513 = vld [vmem:[%s2 + $0xf0] sm:$0xf]
        %v514 = vld [vmem:[%s2 + $0xf4] sm:$0xf]
        %v515 = vld [vmem:[%s2 + $0xf8] sm:$0xf]
        %v516 = vld [vmem:[%s2 + $0xfc] sm:$0xf]
        %v517 = vld [vmem:[%s2 + $0x100] sm:$0xf]
        %v518 = vld [vmem:[%s2 + $0x104] sm:$0xf]
        %v519 = vld [vmem:[%s2 + $0x108] sm:$0xf]
        %v520 = vld [vmem:[%s2 + $0x10c] sm:$0xf]
        %v521 = vld [vmem:[%s2 + $0x110] sm:$0xf]
        %v522 = vld [vmem:[%s2 + $0x114] sm:$0xf]
        %v523 = vld [vmem:[%s2 + $0x118] sm:$0xf]
        %v524 = vld [vmem:[%s2 + $0x11c] sm:$0xf]
        %v525 = vld [vmem:[%s2 + $0x120] sm:$0xf]
        %v526 = vld [vmem:[%s2 + $0x124] sm:$0xf]
        %v527 = vld [vmem:[%s2 + $0x128] sm:$0xf]
        %v528 = vld [vmem:[%s2 + $0x12c] sm:$0xf]
        %v529 = vld [vmem:[%s2 + $0x130] sm:$0xf]
        %v530 = vld [vmem:[%s2 + $0x134] sm:$0xf]
        %v531 = vld [vmem:[%s2 + $0x138] sm:$0xf]
        %v532 = vld [vmem:[%s2 + $0x13c] sm:$0xf]
        %v533 = vld [vmem:[%s2 + $0x140] sm:$0xf]
        %v534 = vld [vmem:[%s2 + $0x144] sm:$0xf]
        %v535 = vld [vmem:[%s2 + $0x148] sm:$0xf]
        %v536 = vld [vmem:[%s2 + $0x14c] sm:$0xf]
        %v537 = vld [vmem:[%s2 + $0x150] sm:$0xf]
        %v538 = vld [vmem:[%s2 + $0x154] sm:$0xf]
        %v539 = vld [vmem:[%s2 + $0x158] sm:$0xf]
        %v540 = vld [vmem:[%s2 + $0x15c] sm:$0xf]
        %v541 = vld [vmem:[%s2 + $0x160] sm:$0xf]
        %v542 = vld [vmem:[%s2 + $0x164] sm:$0xf]
        %v543 = vld [vmem:[%s2 + $0x168] sm:$0xf]
        %v544 = vld [vmem:[%s2 + $0x16c] sm:$0xf]
        %v545 = vld [vmem:[%s2 + $0x170] sm:$0xf]
        %v546 = vld [vmem:[%s2 + $0x174] sm:$0xf]
        %v547 = vld [vmem:[%s2 + $0x178] sm:$0xf]
        %v548 = vld [vmem:[%s2 + $0x17c] sm:$0xf]
        %v549 = vld [vmem:[%s2 + $0x180] sm:$0xf]
        %v550 = vld [vmem:[%s2 + $0x184] sm:$0xf]
        %v551 = vld [vmem:[%s2 + $0x188] sm:$0xf]
        %v552 = vld [vmem:[%s2 + $0x18c] sm:$0xf]
        %v553 = vld [vmem:[%s2 + $0x190] sm:$0xf]
        %v554 = vld [vmem:[%s2 + $0x194] sm:$0xf]
        %v555 = vld [vmem:[%s2 + $0x198] sm:$0xf]
        %v556 = vld [vmem:[%s2 + $0x19c] sm:$0xf]
        %v557 = vld [vmem:[%s2 + $0x1a0] sm:$0xf]
        %v558 = vld [vmem:[%s2 + $0x1a4] sm:$0xf]
        %v559 = vld [vmem:[%s2 + $0x1a8] sm:$0xf]
        %v560 = vld [vmem:[%s2 + $0x1ac] sm:$0xf]
        %v561 = vld [vmem:[%s2 + $0x1b0] sm:$0xf]
        %v562 = vld [vmem:[%s2 + $0x1b4] sm:$0xf]
        %v563 = vld [vmem:[%s2 + $0x1b8] sm:$0xf]
        %v564 = vld [vmem:[%s2 + $0x1bc] sm:$0xf]
        %v565 = vld [vmem:[%s2 + $0x1c0] sm:$0xf]
        %v566 = vld [vmem:[%s2 + $0x1c4] sm:$0xf]
        %v567 = vld [vmem:[%s2 + $0x1c8] sm:$0xf]
        %v568 = vld [vmem:[%s2 + $0x1cc] sm:$0xf]
        %v569 = vld [vmem:[%s2 + $0x1d0] sm:$0xf]
        %v570 = vld [vmem:[%s2 + $0x1d4] sm:$0xf]
        %v571 = vld [vmem:[%s2 + $0x1d8] sm:$0xf]
        %v572 = vld [vmem:[%s2 + $0x1dc] sm:$0xf]
        %v573 = vld [vmem:[%s2 + $0x1e0] sm:$0xf]
        %v574 = vld [vmem:[%s2 + $0x1e4] sm:$0xf]
        %v575 = vld [vmem:[%s2 + $0x1e8] sm:$0xf]
        %v576 = vld [vmem:[%s2 + $0x1ec] sm:$0xf]
        %v577 = vld [vmem:[%s2 + $0x1f0] sm:$0xf]
        %v578 = vld [vmem:[%s2 + $0x1f4] sm:$0xf]
        %v579 = vld [vmem:[%s2 + $0x1f8] sm:$0xf]
        %v580 = vld [vmem:[%s2 + $0x1fc] sm:$0xf]
        %v581 = vld [vmem:[%s2 + $0x200] sm:$0xf]
        %v582 = vld [vmem:[%s2 + $0x204] sm:$0xf]
        %v583 = vld [vmem:[%s2 + $0x208] sm:$0xf]
        %v584 = vld [vmem:[%s2 + $0x20c] sm:$0xf]
        %v585 = vld [vmem:[%s2 + $0x210] sm:$0xf]
        %v586 = vld [vmem:[%s2 + $0x214] sm:$0xf]
        %v587 = vld [vmem:[%s2 + $0x218] sm:$0xf]
        %v588 = vld [vmem:[%s2 + $0x21c] sm:$0xf]
        %v589 = vld [vmem:[%s2 + $0x220] sm:$0xf]
        %v590 = vld [vmem:[%s2 + $0x224] sm:$0xf]
        %v591 = vld [vmem:[%s2 + $0x228] sm:$0xf]
        %v592 = vld [vmem:[%s2 + $0x22c] sm:$0xf]
        %v593 = vld [vmem:[%s2 + $0x230] sm:$0xf]
        %v594 = vld [vmem:[%s2 + $0x234] sm:$0xf]
        %v595 = vld [vmem:[%s2 + $0x238] sm:$0xf]
        %v596 = vld [vmem:[%s2 + $0x23c] sm:$0xf]
        %v637 = vunpack.c.l.b16 %v413
        %v638 = vunpack.c.h.b16 %v413
        %v639 = vunpack.c.l.b16 %v414
        %v640 = vunpack.c.h.b16 %v414
        %v641 = vunpack.c.l.b16 %v415
        %v642 = vunpack.c.h.b16 %v415
        %v643 = vunpack.c.l.b16 %v416
        %v644 = vunpack.c.h.b16 %v416
        %v645 = vunpack.c.l.b16 %v417
        %v646 = vunpack.c.l.b16 %v418
        %v647 = vunpack.c.h.b16 %v418
        %v648 = vunpack.c.l.b16 %v419
        %v649 = vunpack.c.h.b16 %v419
        %v650 = vunpack.c.l.b16 %v420
        %v651 = vunpack.c.h.b16 %v420
        %v652 = vunpack.c.l.b16 %v421
        %v653 = vunpack.c.h.b16 %v421
        %v654 = vunpack.c.l.b16 %v422
        %v655 = vunpack.c.l.b16 %v423
        %v656 = vunpack.c.h.b16 %v423
        %v657 = vunpack.c.l.b16 %v424
        %v658 = vunpack.c.h.b16 %v424
        %v659 = vunpack.c.l.b16 %v425
        %v660 = vunpack.c.h.b16 %v425
        %v661 = vunpack.c.l.b16 %v426
        %v662 = vunpack.c.h.b16 %v426
        %v663 = vunpack.c.l.b16 %v427
        %v664 = vunpack.c.l.b16 %v428
        %v665 = vunpack.c.h.b16 %v428
        %v666 = vunpack.c.l.b16 %v429
        %v667 = vunpack.c.h.b16 %v429
        %v668 = vunpack.c.l.b16 %v430
        %v669 = vunpack.c.h.b16 %v430
        %v670 = vunpack.c.l.b16 %v431
        %v671 = vunpack.c.h.b16 %v431
        %v672 = vunpack.c.l.b16 %v432
        %v673 = vunpack.c.l.b16 %v433
        %v674 = vunpack.c.h.b16 %v433
        %v675 = vunpack.c.l.b16 %v434
        %v676 = vunpack.c.h.b16 %v434
        %v677 = vunpack.c.l.b16 %v435
        %v678 = vunpack.c.h.b16 %v435
        %v679 = vunpack.c.l.b16 %v436
        %v680 = vunpack.c.h.b16 %v436
        %v681 = vunpack.c.l.b16 %v437
        %v682 = vunpack.c.l.b16 %v438
        %v683 = vunpack.c.h.b16 %v438
        %v684 = vunpack.c.l.b16 %v439
        %v685 = vunpack.c.h.b16 %v439
        %v686 = vunpack.c.l.b16 %v440
        %v687 = vunpack.c.h.b16 %v440
        %v688 = vunpack.c.l.b16 %v441
        %v689 = vunpack.c.h.b16 %v441
        %v690 = vunpack.c.l.b16 %v442
        %v691 = vunpack.c.l.b16 %v443
        %v692 = vunpack.c.h.b16 %v443
        %v693 = vunpack.c.l.b16 %v444
        %v694 = vunpack.c.h.b16 %v444
        %v695 = vunpack.c.l.b16 %v445
        %v696 = vunpack.c.h.b16 %v445
        %v697 = vunpack.c.l.b16 %v446
        %v698 = vunpack.c.h.b16 %v446
        %v699 = vunpack.c.l.b16 %v447
        %v700 = vunpack.c.l.b16 %v448
        %v701 = vunpack.c.h.b16 %v448
        %v702 = vunpack.c.l.b16 %v449
        %v703 = vunpack.c.h.b16 %v449
        %v704 = vunpack.c.l.b16 %v450
        %v705 = vunpack.c.h.b16 %v450
        %v706 = vunpack.c.l.b16 %v451
        %v707 = vunpack.c.h.b16 %v451
        %v708 = vunpack.c.l.b16 %v452
        %v709 = vpack.c.b16 %v646, %v637
        %v710 = vpack.c.b16 %v647, %v638
        %v711 = vpack.c.b16 %v648, %v639
        %v712 = vpack.c.b16 %v649, %v640
        %v713 = vpack.c.b16 %v650, %v641
        %v714 = vpack.c.b16 %v651, %v642
        %v715 = vpack.c.b16 %v652, %v643
        %v716 = vpack.c.b16 %v653, %v644
        %v717 = vpack.c.b16 %v654, %v645
        %v718 = vpack.c.b16 %v664, %v655
        %v719 = vpack.c.b16 %v665, %v656
        %v720 = vpack.c.b16 %v666, %v657
        %v721 = vpack.c.b16 %v667, %v658
        %v722 = vpack.c.b16 %v668, %v659
        %v723 = vpack.c.b16 %v669, %v660
        %v724 = vpack.c.b16 %v670, %v661
        %v725 = vpack.c.b16 %v671, %v662
        %v726 = vpack.c.b16 %v672, %v663
        %v727 = vpack.c.b16 %v682, %v673
        %v728 = vpack.c.b16 %v683, %v674
        %v729 = vpack.c.b16 %v684, %v675
        %v730 = vpack.c.b16 %v685, %v676
        %v731 = vpack.c.b16 %v686, %v677
        %v732 = vpack.c.b16 %v687, %v678
        %v733 = vpack.c.b16 %v688, %v679
        %v734 = vpack.c.b16 %v689, %v680
        %v735 = vpack.c.b16 %v690, %v681
        %v736 = vpack.c.b16 %v700, %v691
        %v737 = vpack.c.b16 %v701, %v692
        %v738 = vpack.c.b16 %v702, %v693
        %v739 = vpack.c.b16 %v703, %v694
        %v740 = vpack.c.b16 %v704, %v695
        %v741 = vpack.c.b16 %v705, %v696
        %v742 = vpack.c.b16 %v706, %v697
        %v743 = vpack.c.b16 %v707, %v698
        %v744 = vpack.c.b16 %v708, %v699
        %v925 = vunpack.c.l.b16 %v453
        %v926 = vunpack.c.l.b16 %v454
        %v927 = vunpack.c.l.b16 %v455
        %v928 = vunpack.c.l.b16 %v456
        %v929 = vunpack.c.l.b16 %v457
        %v930 = vunpack.c.l.b16 %v458
        %v931 = vunpack.c.l.b16 %v459
        %v932 = vunpack.c.l.b16 %v460
        %v933 = vunpack.c.l.b16 %v461
        %v934 = vunpack.c.l.b16 %v462
        %v935 = vunpack.c.l.b16 %v463
        %v936 = vunpack.c.l.b16 %v464
        %v937 = vunpack.c.l.b16 %v465
        %v938 = vunpack.c.l.b16 %v466
        %v939 = vunpack.c.l.b16 %v467
        %v940 = vunpack.c.l.b16 %v468
        %v941 = vunpack.c.l.b16 %v469
        %v942 = vunpack.c.l.b16 %v470
        %v943 = vunpack.c.l.b16 %v471
        %v944 = vunpack.c.l.b16 %v472
        %v945 = vunpack.c.l.b16 %v473
        %v946 = vunpack.c.l.b16 %v474
        %v947 = vunpack.c.l.b16 %v475
        %v948 = vunpack.c.l.b16 %v476
        %v949 = vunpack.c.l.b16 %v477
        %v950 = vunpack.c.l.b16 %v478
        %v951 = vunpack.c.l.b16 %v479
        %v952 = vunpack.c.l.b16 %v480
        %v953 = vunpack.c.l.b16 %v481
        %v954 = vunpack.c.l.b16 %v482
        %v955 = vunpack.c.l.b16 %v483
        %v956 = vunpack.c.l.b16 %v484
        %v957 = vunpack.c.l.b16 %v485
        %v958 = vunpack.c.l.b16 %v486
        %v959 = vunpack.c.l.b16 %v487
        %v960 = vunpack.c.l.b16 %v488
        %v961 = vunpack.c.l.b16 %v489
        %v962 = vunpack.c.l.b16 %v490
        %v963 = vunpack.c.l.b16 %v491
        %v964 = vunpack.c.l.b16 %v492
        %v965 = vunpack.c.l.b16 %v493
        %v966 = vunpack.c.l.b16 %v494
        %v967 = vunpack.c.l.b16 %v495
        %v968 = vunpack.c.l.b16 %v496
        %v969 = vunpack.c.l.b16 %v497
        %v970 = vunpack.c.l.b16 %v498
        %v971 = vunpack.c.l.b16 %v499
        %v972 = vunpack.c.l.b16 %v500
        %v973 = vunpack.c.l.b16 %v501
        %v974 = vunpack.c.l.b16 %v502
        %v975 = vunpack.c.l.b16 %v503
        %v976 = vunpack.c.l.b16 %v504
        %v977 = vunpack.c.l.b16 %v505
        %v978 = vunpack.c.l.b16 %v506
        %v979 = vunpack.c.l.b16 %v507
        %v980 = vunpack.c.l.b16 %v508
        %v981 = vunpack.c.l.b16 %v509
        %v982 = vunpack.c.l.b16 %v510
        %v983 = vunpack.c.l.b16 %v511
        %v984 = vunpack.c.l.b16 %v512
        %v985 = vunpack.c.l.b16 %v513
        %v986 = vunpack.c.l.b16 %v514
        %v987 = vunpack.c.l.b16 %v515
        %v988 = vunpack.c.l.b16 %v516
        %v989 = vunpack.c.l.b16 %v517
        %v990 = vunpack.c.l.b16 %v518
        %v991 = vunpack.c.l.b16 %v519
        %v992 = vunpack.c.l.b16 %v520
        %v993 = vunpack.c.l.b16 %v521
        %v994 = vunpack.c.l.b16 %v522
        %v995 = vunpack.c.l.b16 %v523
        %v996 = vunpack.c.l.b16 %v524
        %v997 = vunpack.c.l.b16 %v525
        %v998 = vunpack.c.l.b16 %v526
        %v999 = vunpack.c.l.b16 %v527
        %v1000 = vunpack.c.l.b16 %v528
        %v1001 = vunpack.c.l.b16 %v529
        %v1002 = vunpack.c.l.b16 %v530
        %v1003 = vunpack.c.l.b16 %v531
        %v1004 = vunpack.c.l.b16 %v532
        %v1005 = vunpack.c.l.b16 %v533
        %v1006 = vunpack.c.l.b16 %v534
        %v1007 = vunpack.c.l.b16 %v535
        %v1008 = vunpack.c.l.b16 %v536
        %v1009 = vunpack.c.l.b16 %v537
        %v1010 = vunpack.c.l.b16 %v538
        %v1011 = vunpack.c.l.b16 %v539
        %v1012 = vunpack.c.l.b16 %v540
        %v1013 = vunpack.c.l.b16 %v541
        %v1014 = vunpack.c.l.b16 %v542
        %v1015 = vunpack.c.l.b16 %v543
        %v1016 = vunpack.c.l.b16 %v544
        %v1017 = vunpack.c.l.b16 %v545
        %v1018 = vunpack.c.l.b16 %v546
        %v1019 = vunpack.c.l.b16 %v547
        %v1020 = vunpack.c.l.b16 %v548
        %v1021 = vunpack.c.l.b16 %v549
        %v1022 = vunpack.c.l.b16 %v550
        %v1023 = vunpack.c.l.b16 %v551
        %v1024 = vunpack.c.l.b16 %v552
        %v1025 = vunpack.c.l.b16 %v553
        %v1026 = vunpack.c.l.b16 %v554
        %v1027 = vunpack.c.l.b16 %v555
        %v1028 = vunpack.c.l.b16 %v556
        %v1029 = vunpack.c.l.b16 %v557
        %v1030 = vunpack.c.l.b16 %v558
        %v1031 = vunpack.c.l.b16 %v559
        %v1032 = vunpack.c.l.b16 %v560
        %v1033 = vunpack.c.l.b16 %v561
        %v1034 = vunpack.c.l.b16 %v562
        %v1035 = vunpack.c.l.b16 %v563
        %v1036 = vunpack.c.l.b16 %v564
        %v1037 = vunpack.c.l.b16 %v565
        %v1038 = vunpack.c.l.b16 %v566
        %v1039 = vunpack.c.l.b16 %v567
        %v1040 = vunpack.c.l.b16 %v568
        %v1041 = vunpack.c.l.b16 %v569
        %v1042 = vunpack.c.l.b16 %v570
        %v1043 = vunpack.c.l.b16 %v571
        %v1044 = vunpack.c.l.b16 %v572
        %v1045 = vunpack.c.l.b16 %v573
        %v1046 = vunpack.c.l.b16 %v574
        %v1047 = vunpack.c.l.b16 %v575
        %v1048 = vunpack.c.l.b16 %v576
        %v1049 = vunpack.c.l.b16 %v577
        %v1050 = vunpack.c.l.b16 %v578
        %v1051 = vunpack.c.l.b16 %v579
        %v1052 = vunpack.c.l.b16 %v580
        %v1053 = vunpack.c.l.b16 %v581
        %v1054 = vunpack.c.l.b16 %v582
        %v1055 = vunpack.c.l.b16 %v583
        %v1056 = vunpack.c.l.b16 %v584
        %v1057 = vunpack.c.l.b16 %v585
        %v1058 = vunpack.c.l.b16 %v586
        %v1059 = vunpack.c.l.b16 %v587
        %v1060 = vunpack.c.l.b16 %v588
        %v1061 = vunpack.c.l.b16 %v589
        %v1062 = vunpack.c.l.b16 %v590
        %v1063 = vunpack.c.l.b16 %v591
        %v1064 = vunpack.c.l.b16 %v592
        %v1065 = vunpack.c.l.b16 %v593
        %v1066 = vunpack.c.l.b16 %v594
        %v1067 = vunpack.c.l.b16 %v595
        %v1068 = vunpack.c.l.b16 %v596
        %v1069 = vpack.c.b16 %v926, %v925
        %v1070 = vpack.c.b16 %v928, %v927
        %v1071 = vpack.c.b16 %v930, %v929
        %v1072 = vpack.c.b16 %v932, %v931
        %v1073 = vpack.c.b16 %v934, %v933
        %v1074 = vpack.c.b16 %v936, %v935
        %v1075 = vpack.c.b16 %v938, %v937
        %v1076 = vpack.c.b16 %v940, %v939
        %v1077 = vpack.c.b16 %v942, %v941
        %v1078 = vpack.c.b16 %v944, %v943
        %v1079 = vpack.c.b16 %v946, %v945
        %v1080 = vpack.c.b16 %v948, %v947
        %v1081 = vpack.c.b16 %v950, %v949
        %v1082 = vpack.c.b16 %v952, %v951
        %v1083 = vpack.c.b16 %v954, %v953
        %v1084 = vpack.c.b16 %v956, %v955
        %v1085 = vpack.c.b16 %v958, %v957
        %v1086 = vpack.c.b16 %v960, %v959
        %v1087 = vpack.c.b16 %v962, %v961
        %v1088 = vpack.c.b16 %v964, %v963
        %v1089 = vpack.c.b16 %v966, %v965
        %v1090 = vpack.c.b16 %v968, %v967
        %v1091 = vpack.c.b16 %v970, %v969
        %v1092 = vpack.c.b16 %v972, %v971
        %v1093 = vpack.c.b16 %v974, %v973
        %v1094 = vpack.c.b16 %v976, %v975
        %v1095 = vpack.c.b16 %v978, %v977
        %v1096 = vpack.c.b16 %v980, %v979
        %v1097 = vpack.c.b16 %v982, %v981
        %v1098 = vpack.c.b16 %v984, %v983
        %v1099 = vpack.c.b16 %v986, %v985
        %v1100 = vpack.c.b16 %v988, %v987
        %v1101 = vpack.c.b16 %v990, %v989
        %v1102 = vpack.c.b16 %v992, %v991
        %v1103 = vpack.c.b16 %v994, %v993
        %v1104 = vpack.c.b16 %v996, %v995
        %v1105 = vpack.c.b16 %v998, %v997
        %v1106 = vpack.c.b16 %v1000, %v999
        %v1107 = vpack.c.b16 %v1002, %v1001
        %v1108 = vpack.c.b16 %v1004, %v1003
        %v1109 = vpack.c.b16 %v1006, %v1005
        %v1110 = vpack.c.b16 %v1008, %v1007
        %v1111 = vpack.c.b16 %v1010, %v1009
        %v1112 = vpack.c.b16 %v1012, %v1011
        %v1113 = vpack.c.b16 %v1014, %v1013
        %v1114 = vpack.c.b16 %v1016, %v1015
        %v1115 = vpack.c.b16 %v1018, %v1017
        %v1116 = vpack.c.b16 %v1020, %v1019
        %v1117 = vpack.c.b16 %v1022, %v1021
        %v1118 = vpack.c.b16 %v1024, %v1023
        %v1119 = vpack.c.b16 %v1026, %v1025
        %v1120 = vpack.c.b16 %v1028, %v1027
        %v1121 = vpack.c.b16 %v1030, %v1029
        %v1122 = vpack.c.b16 %v1032, %v1031
        %v1123 = vpack.c.b16 %v1034, %v1033
        %v1124 = vpack.c.b16 %v1036, %v1035
        %v1125 = vpack.c.b16 %v1038, %v1037
        %v1126 = vpack.c.b16 %v1040, %v1039
        %v1127 = vpack.c.b16 %v1042, %v1041
        %v1128 = vpack.c.b16 %v1044, %v1043
        %v1129 = vpack.c.b16 %v1046, %v1045
        %v1130 = vpack.c.b16 %v1048, %v1047
        %v1131 = vpack.c.b16 %v1050, %v1049
        %v1132 = vpack.c.b16 %v1052, %v1051
        %v1133 = vpack.c.b16 %v1054, %v1053
        %v1134 = vpack.c.b16 %v1056, %v1055
        %v1135 = vpack.c.b16 %v1058, %v1057
        %v1136 = vpack.c.b16 %v1060, %v1059
        %v1137 = vpack.c.b16 %v1062, %v1061
        %v1138 = vpack.c.b16 %v1064, %v1063
        %v1139 = vpack.c.b16 %v1066, %v1065
        %v1140 = vpack.c.b16 %v1068, %v1067
        %1213 = vmatpush.bf16.msra.mxu0 %v1076
        %1214 = vmatpush.bf16.msra.mxu0 %v1075
        %1215 = vmatpush.bf16.msra.mxu0 %v1074
        %1216 = vmatpush.bf16.msra.mxu0 %v1073
        %1217 = vmatpush.bf16.msra.mxu0 %v1072
        %1218 = vmatpush.bf16.msra.mxu0 %v1071
        %1219 = vmatpush.bf16.msra.mxu0 %v1070
        %1220 = vmatpush.bf16.msra.mxu0 %v1069
        %1221 = vmatmul.bf16.gmra.mxu0 %v709
        %v1222 = vpop.f32.mrf.mxu0
        %v1223 = vadd.f32 0.0, %v1222
        %v1224 = vpop.f32.mrf.mxu0
        %v1225 = vadd.f32 0.0, %v1224
        %1226 = vmatmul.bf16.gmra.mxu0 %v718
        %v1227 = vpop.f32.mrf.mxu0
        %v1228 = vadd.f32 0.0, %v1227
        %v1229 = vpop.f32.mrf.mxu0
        %v1230 = vadd.f32 0.0, %v1229
        %1231 = vmatmul.bf16.gmra.mxu0 %v727
        %v1232 = vpop.f32.mrf.mxu0
        %v1233 = vadd.f32 0.0, %v1232
        %v1234 = vpop.f32.mrf.mxu0
        %v1235 = vadd.f32 0.0, %v1234
        %1236 = vmatmul.bf16.gmra.mxu0 %v736
        %v1237 = vpop.f32.mrf.mxu0
        %v1238 = vadd.f32 0.0, %v1237
        %v1239 = vpop.f32.mrf.mxu0
        %v1240 = vadd.f32 0.0, %v1239
        %1241 = vdwg.mxu0
        %1242 = vmatpush.bf16.msra.mxu0 %v1084
        %1243 = vmatpush.bf16.msra.mxu0 %v1083
        %1244 = vmatpush.bf16.msra.mxu0 %v1082
        %1245 = vmatpush.bf16.msra.mxu0 %v1081
        %1246 = vmatpush.bf16.msra.mxu0 %v1080
        %1247 = vmatpush.bf16.msra.mxu0 %v1079
        %1248 = vmatpush.bf16.msra.mxu0 %v1078
        %1249 = vmatpush.bf16.msra.mxu0 %v1077
        %1250 = vmatmul.bf16.gmra.mxu0 %v710
        %v1251 = vpop.f32.mrf.mxu0
        %v1252 = vadd.f32 %v1223, %v1251
        %v1253 = vpop.f32.mrf.mxu0
        %v1254 = vadd.f32 %v1225, %v1253
        %1255 = vmatmul.bf16.gmra.mxu0 %v719
        %v1256 = vpop.f32.mrf.mxu0
        %v1257 = vadd.f32 %v1228, %v1256
        %v1258 = vpop.f32.mrf.mxu0
        %v1259 = vadd.f32 %v1230, %v1258
        %1260 = vmatmul.bf16.gmra.mxu0 %v728
        %v1261 = vpop.f32.mrf.mxu0
        %v1262 = vadd.f32 %v1233, %v1261
        %v1263 = vpop.f32.mrf.mxu0
        %v1264 = vadd.f32 %v1235, %v1263
        %1265 = vmatmul.bf16.gmra.mxu0 %v737
        %v1266 = vpop.f32.mrf.mxu0
        %v1267 = vadd.f32 %v1238, %v1266
        %v1268 = vpop.f32.mrf.mxu0
        %v1269 = vadd.f32 %v1240, %v1268
        %1270 = vdwg.mxu0
        %1271 = vmatpush.bf16.msra.mxu0 %v1092
        %1272 = vmatpush.bf16.msra.mxu0 %v1091
        %1273 = vmatpush.bf16.msra.mxu0 %v1090
        %1274 = vmatpush.bf16.msra.mxu0 %v1089
        %1275 = vmatpush.bf16.msra.mxu0 %v1088
        %1276 = vmatpush.bf16.msra.mxu0 %v1087
        %1277 = vmatpush.bf16.msra.mxu0 %v1086
        %1278 = vmatpush.bf16.msra.mxu0 %v1085
        %1279 = vmatmul.bf16.gmra.mxu0 %v711
        %v1280 = vpop.f32.mrf.mxu0
        %v1281 = vadd.f32 %v1252, %v1280
        %v1282 = vpop.f32.mrf.mxu0
        %v1283 = vadd.f32 %v1254, %v1282
        %1284 = vmatmul.bf16.gmra.mxu0 %v720
        %v1285 = vpop.f32.mrf.mxu0
        %v1286 = vadd.f32 %v1257, %v1285
        %v1287 = vpop.f32.mrf.mxu0
        %v1288 = vadd.f32 %v1259, %v1287
        %1289 = vmatmul.bf16.gmra.mxu0 %v729
        %v1290 = vpop.f32.mrf.mxu0
        %v1291 = vadd.f32 %v1262, %v1290
        %v1292 = vpop.f32.mrf.mxu0
        %v1293 = vadd.f32 %v1264, %v1292
        %1294 = vmatmul.bf16.gmra.mxu0 %v738
        %v1295 = vpop.f32.mrf.mxu0
        %v1296 = vadd.f32 %v1267, %v1295
        %v1297 = vpop.f32.mrf.mxu0
        %v1298 = vadd.f32 %v1269, %v1297
        %1299 = vdwg.mxu0
        %1300 = vmatpush.bf16.msra.mxu0 %v1100
        %1301 = vmatpush.bf16.msra.mxu0 %v1099
        %1302 = vmatpush.bf16.msra.mxu0 %v1098
        %1303 = vmatpush.bf16.msra.mxu0 %v1097
        %1304 = vmatpush.bf16.msra.mxu0 %v1096
        %1305 = vmatpush.bf16.msra.mxu0 %v1095
        %1306 = vmatpush.bf16.msra.mxu0 %v1094
        %1307 = vmatpush.bf16.msra.mxu0 %v1093
        %1308 = vmatmul.bf16.gmra.mxu0 %v712
        %v1309 = vpop.f32.mrf.mxu0
        %v1310 = vadd.f32 %v1281, %v1309
        %v1311 = vpop.f32.mrf.mxu0
        %v1312 = vadd.f32 %v1283, %v1311
        %1313 = vmatmul.bf16.gmra.mxu0 %v721
        %v1314 = vpop.f32.mrf.mxu0
        %v1315 = vadd.f32 %v1286, %v1314
        %v1316 = vpop.f32.mrf.mxu0
        %v1317 = vadd.f32 %v1288, %v1316
        %1318 = vmatmul.bf16.gmra.mxu0 %v730
        %v1319 = vpop.f32.mrf.mxu0
        %v1320 = vadd.f32 %v1291, %v1319
        %v1321 = vpop.f32.mrf.mxu0
        %v1322 = vadd.f32 %v1293, %v1321
        %1323 = vmatmul.bf16.gmra.mxu0 %v739
        %v1324 = vpop.f32.mrf.mxu0
        %v1325 = vadd.f32 %v1296, %v1324
        %v1326 = vpop.f32.mrf.mxu0
        %v1327 = vadd.f32 %v1298, %v1326
        %1328 = vdwg.mxu0
        %1329 = vmatpush.bf16.msra.mxu0 %v1108
        %1330 = vmatpush.bf16.msra.mxu0 %v1107
        %1331 = vmatpush.bf16.msra.mxu0 %v1106
        %1332 = vmatpush.bf16.msra.mxu0 %v1105
        %1333 = vmatpush.bf16.msra.mxu0 %v1104
        %1334 = vmatpush.bf16.msra.mxu0 %v1103
        %1335 = vmatpush.bf16.msra.mxu0 %v1102
        %1336 = vmatpush.bf16.msra.mxu0 %v1101
        %1337 = vmatmul.bf16.gmra.mxu0 %v713
        %v1338 = vpop.f32.mrf.mxu0
        %v1339 = vadd.f32 %v1310, %v1338
        %v1340 = vpop.f32.mrf.mxu0
        %v1341 = vadd.f32 %v1312, %v1340
        %1342 = vmatmul.bf16.gmra.mxu0 %v722
        %v1343 = vpop.f32.mrf.mxu0
        %v1344 = vadd.f32 %v1315, %v1343
        %v1345 = vpop.f32.mrf.mxu0
        %v1346 = vadd.f32 %v1317, %v1345
        %1347 = vmatmul.bf16.gmra.mxu0 %v731
        %v1348 = vpop.f32.mrf.mxu0
        %v1349 = vadd.f32 %v1320, %v1348
        %v1350 = vpop.f32.mrf.mxu0
        %v1351 = vadd.f32 %v1322, %v1350
        %1352 = vmatmul.bf16.gmra.mxu0 %v740
        %v1353 = vpop.f32.mrf.mxu0
        %v1354 = vadd.f32 %v1325, %v1353
        %v1355 = vpop.f32.mrf.mxu0
        %v1356 = vadd.f32 %v1327, %v1355
        %1357 = vdwg.mxu0
        %1358 = vmatpush.bf16.msra.mxu0 %v1116
        %1359 = vmatpush.bf16.msra.mxu0 %v1115
        %1360 = vmatpush.bf16.msra.mxu0 %v1114
        %1361 = vmatpush.bf16.msra.mxu0 %v1113
        %1362 = vmatpush.bf16.msra.mxu0 %v1112
        %1363 = vmatpush.bf16.msra.mxu0 %v1111
        %1364 = vmatpush.bf16.msra.mxu0 %v1110
        %1365 = vmatpush.bf16.msra.mxu0 %v1109
        %1366 = vmatmul.bf16.gmra.mxu0 %v714
        %v1367 = vpop.f32.mrf.mxu0
        %v1368 = vadd.f32 %v1339, %v1367
        %v1369 = vpop.f32.mrf.mxu0
        %v1370 = vadd.f32 %v1341, %v1369
        %1371 = vmatmul.bf16.gmra.mxu0 %v723
        %v1372 = vpop.f32.mrf.mxu0
        %v1373 = vadd.f32 %v1344, %v1372
        %v1374 = vpop.f32.mrf.mxu0
        %v1375 = vadd.f32 %v1346, %v1374
        %1376 = vmatmul.bf16.gmra.mxu0 %v732
        %v1377 = vpop.f32.mrf.mxu0
        %v1378 = vadd.f32 %v1349, %v1377
        %v1379 = vpop.f32.mrf.mxu0
        %v1380 = vadd.f32 %v1351, %v1379
        %1381 = vmatmul.bf16.gmra.mxu0 %v741
        %v1382 = vpop.f32.mrf.mxu0
        %v1383 = vadd.f32 %v1354, %v1382
        %v1384 = vpop.f32.mrf.mxu0
        %v1385 = vadd.f32 %v1356, %v1384
        %1386 = vdwg.mxu0
        %1387 = vmatpush.bf16.msra.mxu0 %v1124
        %1388 = vmatpush.bf16.msra.mxu0 %v1123
        %1389 = vmatpush.bf16.msra.mxu0 %v1122
        %1390 = vmatpush.bf16.msra.mxu0 %v1121
        %1391 = vmatpush.bf16.msra.mxu0 %v1120
        %1392 = vmatpush.bf16.msra.mxu0 %v1119
        %1393 = vmatpush.bf16.msra.mxu0 %v1118
        %1394 = vmatpush.bf16.msra.mxu0 %v1117
        %1395 = vmatmul.bf16.gmra.mxu0 %v715
        %v1396 = vpop.f32.mrf.mxu0
        %v1397 = vadd.f32 %v1368, %v1396
        %v1398 = vpop.f32.mrf.mxu0
        %v1399 = vadd.f32 %v1370, %v1398
        %1400 = vmatmul.bf16.gmra.mxu0 %v724
        %v1401 = vpop.f32.mrf.mxu0
        %v1402 = vadd.f32 %v1373, %v1401
        %v1403 = vpop.f32.mrf.mxu0
        %v1404 = vadd.f32 %v1375, %v1403
        %1405 = vmatmul.bf16.gmra.mxu0 %v733
        %v1406 = vpop.f32.mrf.mxu0
        %v1407 = vadd.f32 %v1378, %v1406
        %v1408 = vpop.f32.mrf.mxu0
        %v1409 = vadd.f32 %v1380, %v1408
        %1410 = vmatmul.bf16.gmra.mxu0 %v742
        %v1411 = vpop.f32.mrf.mxu0
        %v1412 = vadd.f32 %v1383, %v1411
        %v1413 = vpop.f32.mrf.mxu0
        %v1414 = vadd.f32 %v1385, %v1413
        %1415 = vdwg.mxu0
        %1416 = vmatpush.bf16.msra.mxu0 %v1132
        %1417 = vmatpush.bf16.msra.mxu0 %v1131
        %1418 = vmatpush.bf16.msra.mxu0 %v1130
        %1419 = vmatpush.bf16.msra.mxu0 %v1129
        %1420 = vmatpush.bf16.msra.mxu0 %v1128
        %1421 = vmatpush.bf16.msra.mxu0 %v1127
        %1422 = vmatpush.bf16.msra.mxu0 %v1126
        %1423 = vmatpush.bf16.msra.mxu0 %v1125
        %1424 = vmatmul.bf16.gmra.mxu0 %v716
        %v1425 = vpop.f32.mrf.mxu0
        %v1426 = vadd.f32 %v1397, %v1425
        %v1427 = vpop.f32.mrf.mxu0
        %v1428 = vadd.f32 %v1399, %v1427
        %1429 = vmatmul.bf16.gmra.mxu0 %v725
        %v1430 = vpop.f32.mrf.mxu0
        %v1431 = vadd.f32 %v1402, %v1430
        %v1432 = vpop.f32.mrf.mxu0
        %v1433 = vadd.f32 %v1404, %v1432
        %1434 = vmatmul.bf16.gmra.mxu0 %v734
        %v1435 = vpop.f32.mrf.mxu0
        %v1436 = vadd.f32 %v1407, %v1435
        %v1437 = vpop.f32.mrf.mxu0
        %v1438 = vadd.f32 %v1409, %v1437
        %1439 = vmatmul.bf16.gmra.mxu0 %v743
        %v1440 = vpop.f32.mrf.mxu0
        %v1441 = vadd.f32 %v1412, %v1440
        %v1442 = vpop.f32.mrf.mxu0
        %v1443 = vadd.f32 %v1414, %v1442
        %1444 = vdwg.mxu0
        %1445 = vmatpush.bf16.msra.mxu0 %v1140
        %1446 = vmatpush.bf16.msra.mxu0 %v1139
        %1447 = vmatpush.bf16.msra.mxu0 %v1138
        %1448 = vmatpush.bf16.msra.mxu0 %v1137
        %1449 = vmatpush.bf16.msra.mxu0 %v1136
        %1450 = vmatpush.bf16.msra.mxu0 %v1135
        %1451 = vmatpush.bf16.msra.mxu0 %v1134
        %1452 = vmatpush.bf16.msra.mxu0 %v1133
        %1453 = vmatmul.bf16.gmra.mxu0 %v717
        %v1454 = vpop.f32.mrf.mxu0
        %v1455 = vadd.f32 %v1426, %v1454
        %v1456 = vpop.f32.mrf.mxu0
        %v1457 = vadd.f32 %v1428, %v1456
        %1458 = vmatmul.bf16.gmra.mxu0 %v726
        %v1459 = vpop.f32.mrf.mxu0
        %v1460 = vadd.f32 %v1431, %v1459
        %v1461 = vpop.f32.mrf.mxu0
        %v1462 = vadd.f32 %v1433, %v1461
        %1463 = vmatmul.bf16.gmra.mxu0 %v735
        %v1464 = vpop.f32.mrf.mxu0
        %v1465 = vadd.f32 %v1436, %v1464
        %v1466 = vpop.f32.mrf.mxu0
        %v1467 = vadd.f32 %v1438, %v1466
        %1468 = vmatmul.bf16.gmra.mxu0 %v744
        %v1469 = vpop.f32.mrf.mxu0
        %v1470 = vadd.f32 %v1441, %v1469
        %v1471 = vpop.f32.mrf.mxu0
        %v1472 = vadd.f32 %v1443, %v1471
        %1473 = vdwg.mxu0
        %v1474 = vld [vmem:[%s3] sm:$0x1]
        %v1476 = vperm.slane %v1474, 0
        %v1478 = vmul.f32 %v1455, %v1476
        %v1479 = vmul.f32 %v1457, %v1476
        %v1480 = vmul.f32 %v1460, %v1476
        %v1481 = vmul.f32 %v1462, %v1476
        %v1482 = vmul.f32 %v1465, %v1476
        %v1483 = vmul.f32 %v1467, %v1476
        %v1484 = vmul.f32 %v1470, %v1476
        %v1485 = vmul.f32 %v1472, %v1476
        %v1486 = vld [vmem:[%s4] sm:$0x1]
        %v1488 = vperm.slane %v1486, 0
        %v1490 = vadd.f32 %v1478, %v1488
        %v1491 = vadd.f32 %v1479, %v1488
        %v1492 = vadd.f32 %v1480, %v1488
        %v1493 = vadd.f32 %v1481, %v1488
        %v1494 = vadd.f32 %v1482, %v1488
        %v1495 = vadd.f32 %v1483, %v1488
        %v1496 = vadd.f32 %v1484, %v1488
        %v1497 = vadd.f32 %v1485, %v1488
        %v1498 = vmax.f32 %v1490, 0.0
        %v1499 = vmax.f32 %v1491, 0.0
        %v1500 = vmax.f32 %v1492, 0.0
        %v1501 = vmax.f32 %v1493, 0.0
        %v1502 = vmax.f32 %v1494, 0.0
        %v1503 = vmax.f32 %v1495, 0.0
        %v1504 = vmax.f32 %v1496, 0.0
        %v1505 = vmax.f32 %v1497, 0.0
        %v1506 = vpack.c.bf16 %v1499, %v1498
        %v1507 = vpack.c.bf16 %v1501, %v1500
        %v1508 = vpack.c.bf16 %v1503, %v1502
        %v1509 = vpack.c.bf16 %v1505, %v1504
        %v1510 = vld [vmem:[%s5] sm:$0xf]
        %v1511 = vld [vmem:[%s5 + $0x4] sm:$0xf]
        %v1512 = vld [vmem:[%s5 + $0x8] sm:$0xf]
        %v1513 = vld [vmem:[%s5 + $0xc] sm:$0xf]
        %v1514 = vld [vmem:[%s5 + $0x10] sm:$0xf]
        %v1515 = vld [vmem:[%s5 + $0x14] sm:$0xf]
        %v1516 = vld [vmem:[%s5 + $0x18] sm:$0xf]
        %v1517 = vld [vmem:[%s5 + $0x1c] sm:$0xf]
        %v1518 = vld [vmem:[%s5 + $0x20] sm:$0xf]
        %v1519 = vld [vmem:[%s5 + $0x24] sm:$0xf]
        %v1520 = vld [vmem:[%s5 + $0x28] sm:$0xf]
        %v1521 = vld [vmem:[%s5 + $0x2c] sm:$0xf]
        %v1522 = vld [vmem:[%s5 + $0x30] sm:$0xf]
        %v1523 = vld [vmem:[%s5 + $0x34] sm:$0xf]
        %v1524 = vld [vmem:[%s5 + $0x38] sm:$0xf]
        %v1525 = vld [vmem:[%s5 + $0x3c] sm:$0xf]
        %v1542 = vunpack.c.l.b16 %v1510
        %v1543 = vunpack.c.l.b16 %v1511
        %v1544 = vunpack.c.l.b16 %v1512
        %v1545 = vunpack.c.l.b16 %v1513
        %v1546 = vunpack.c.l.b16 %v1514
        %v1547 = vunpack.c.l.b16 %v1515
        %v1548 = vunpack.c.l.b16 %v1516
        %v1549 = vunpack.c.l.b16 %v1517
        %v1550 = vunpack.c.l.b16 %v1518
        %v1551 = vunpack.c.l.b16 %v1519
        %v1552 = vunpack.c.l.b16 %v1520
        %v1553 = vunpack.c.l.b16 %v1521
        %v1554 = vunpack.c.l.b16 %v1522
        %v1555 = vunpack.c.l.b16 %v1523
        %v1556 = vunpack.c.l.b16 %v1524
        %v1557 = vunpack.c.l.b16 %v1525
        %v1558 = vpack.c.b16 %v1543, %v1542
        %v1559 = vpack.c.b16 %v1545, %v1544
        %v1560 = vpack.c.b16 %v1547, %v1546
        %v1561 = vpack.c.b16 %v1549, %v1548
        %v1562 = vpack.c.b16 %v1551, %v1550
        %v1563 = vpack.c.b16 %v1553, %v1552
        %v1564 = vpack.c.b16 %v1555, %v1554
        %v1565 = vpack.c.b16 %v1557, %v1556
        %1574 = vmatpush.bf16.msra.mxu0 %v1565
        %1575 = vmatpush.bf16.msra.mxu0 %v1564
        %1576 = vmatpush.bf16.msra.mxu0 %v1563
        %1577 = vmatpush.bf16.msra.mxu0 %v1562
        %1578 = vmatpush.bf16.msra.mxu0 %v1561
        %1579 = vmatpush.bf16.msra.mxu0 %v1560
        %1580 = vmatpush.bf16.msra.mxu0 %v1559
        %1581 = vmatpush.bf16.msra.mxu0 %v1558
        %1582 = vmatmul.bf16.gmra.mxu0 %v1506
        %v1583 = vpop.f32.mrf.mxu0
        %v1584 = vadd.f32 0.0, %v1583
        %v1585 = vpop.f32.mrf.mxu0
        %v1586 = vadd.f32 0.0, %v1585
        %1587 = vmatmul.bf16.gmra.mxu0 %v1507
        %v1588 = vpop.f32.mrf.mxu0
        %v1589 = vadd.f32 0.0, %v1588
        %v1590 = vpop.f32.mrf.mxu0
        %v1591 = vadd.f32 0.0, %v1590
        %1592 = vmatmul.bf16.gmra.mxu0 %v1508
        %v1593 = vpop.f32.mrf.mxu0
        %v1594 = vadd.f32 0.0, %v1593
        %v1595 = vpop.f32.mrf.mxu0
        %v1596 = vadd.f32 0.0, %v1595
        %1597 = vmatmul.bf16.gmra.mxu0 %v1509
        %v1598 = vpop.f32.mrf.mxu0
        %v1599 = vadd.f32 0.0, %v1598
        %v1600 = vpop.f32.mrf.mxu0
        %v1601 = vadd.f32 0.0, %v1600
        %1602 = vdwg.mxu0
        %v1603 = vld [vmem:[%s6] sm:$0x1]
        %v1605 = vperm.slane %v1603, 0
        %v1607 = vmul.f32 %v1584, %v1605
        %v1608 = vmul.f32 %v1586, %v1605
        %v1609 = vmul.f32 %v1589, %v1605
        %v1610 = vmul.f32 %v1591, %v1605
        %v1611 = vmul.f32 %v1594, %v1605
        %v1612 = vmul.f32 %v1596, %v1605
        %v1613 = vmul.f32 %v1599, %v1605
        %v1614 = vmul.f32 %v1601, %v1605
        %v1615 = vld [vmem:[%s7] sm:$0x1]
        %v1617 = vperm.slane %v1615, 0
        %v1619 = vadd.f32 %v1607, %v1617
        %v1620 = vadd.f32 %v1608, %v1617
        %v1621 = vadd.f32 %v1609, %v1617
        %v1622 = vadd.f32 %v1610, %v1617
        %v1623 = vadd.f32 %v1611, %v1617
        %v1624 = vadd.f32 %v1612, %v1617
        %v1625 = vadd.f32 %v1613, %v1617
        %v1626 = vadd.f32 %v1614, %v1617
        %v1627 = vld [vmem:[%s410] sm:$0xff]
        %v1628 = vld [vmem:[%s410 + $0x8] sm:$0xff]
        %v1629 = vld [vmem:[%s410 + $0x10] sm:$0xff]
        %v1630 = vld [vmem:[%s410 + $0x18] sm:$0xff]
        %v1631 = vld [vmem:[%s410 + $0x20] sm:$0xff]
        %v1632 = vld [vmem:[%s410 + $0x28] sm:$0xff]
        %v1633 = vld [vmem:[%s410 + $0x30] sm:$0xff]
        %v1634 = vld [vmem:[%s410 + $0x38] sm:$0xff]
        %v1635 = vpack.c.bf16 %v1628, %v1627
        %v1636 = vpack.c.bf16 %v1630, %v1629
        %v1637 = vpack.c.bf16 %v1632, %v1631
        %v1638 = vpack.c.bf16 %v1634, %v1633
        %v1639 = vld [vmem:[%s8] sm:$0xf]
        %v1640 = vld [vmem:[%s8 + $0x4] sm:$0xf]
        %v1641 = vld [vmem:[%s8 + $0x8] sm:$0xf]
        %v1642 = vld [vmem:[%s8 + $0xc] sm:$0xf]
        %v1643 = vld [vmem:[%s8 + $0x10] sm:$0xf]
        %v1644 = vld [vmem:[%s8 + $0x14] sm:$0xf]
        %v1645 = vld [vmem:[%s8 + $0x18] sm:$0xf]
        %v1646 = vld [vmem:[%s8 + $0x1c] sm:$0xf]
        %v1647 = vld [vmem:[%s8 + $0x20] sm:$0xf]
        %v1648 = vld [vmem:[%s8 + $0x24] sm:$0xf]
        %v1649 = vld [vmem:[%s8 + $0x28] sm:$0xf]
        %v1650 = vld [vmem:[%s8 + $0x2c] sm:$0xf]
        %v1651 = vld [vmem:[%s8 + $0x30] sm:$0xf]
        %v1652 = vld [vmem:[%s8 + $0x34] sm:$0xf]
        %v1653 = vld [vmem:[%s8 + $0x38] sm:$0xf]
        %v1654 = vld [vmem:[%s8 + $0x3c] sm:$0xf]
        %v1671 = vunpack.c.l.b16 %v1639
        %v1672 = vunpack.c.l.b16 %v1640
        %v1673 = vunpack.c.l.b16 %v1641
        %v1674 = vunpack.c.l.b16 %v1642
        %v1675 = vunpack.c.l.b16 %v1643
        %v1676 = vunpack.c.l.b16 %v1644
        %v1677 = vunpack.c.l.b16 %v1645
        %v1678 = vunpack.c.l.b16 %v1646
        %v1679 = vunpack.c.l.b16 %v1647
        %v1680 = vunpack.c.l.b16 %v1648
        %v1681 = vunpack.c.l.b16 %v1649
        %v1682 = vunpack.c.l.b16 %v1650
        %v1683 = vunpack.c.l.b16 %v1651
        %v1684 = vunpack.c.l.b16 %v1652
        %v1685 = vunpack.c.l.b16 %v1653
        %v1686 = vunpack.c.l.b16 %v1654
        %v1687 = vpack.c.b16 %v1672, %v1671
        %v1688 = vpack.c.b16 %v1674, %v1673
        %v1689 = vpack.c.b16 %v1676, %v1675
        %v1690 = vpack.c.b16 %v1678, %v1677
        %v1691 = vpack.c.b16 %v1680, %v1679
        %v1692 = vpack.c.b16 %v1682, %v1681
        %v1693 = vpack.c.b16 %v1684, %v1683
        %v1694 = vpack.c.b16 %v1686, %v1685
        %1703 = vmatpush.bf16.msra.mxu0 %v1694
        %1704 = vmatpush.bf16.msra.mxu0 %v1693
        %1705 = vmatpush.bf16.msra.mxu0 %v1692
        %1706 = vmatpush.bf16.msra.mxu0 %v1691
        %1707 = vmatpush.bf16.msra.mxu0 %v1690
        %1708 = vmatpush.bf16.msra.mxu0 %v1689
        %1709 = vmatpush.bf16.msra.mxu0 %v1688
        %1710 = vmatpush.bf16.msra.mxu0 %v1687
        %1711 = vmatmul.bf16.gmra.mxu0 %v1635
        %v1712 = vpop.f32.mrf.mxu0
        %v1713 = vadd.f32 0.0, %v1712
        %v1714 = vpop.f32.mrf.mxu0
        %v1715 = vadd.f32 0.0, %v1714
        %1716 = vmatmul.bf16.gmra.mxu0 %v1636
        %v1717 = vpop.f32.mrf.mxu0
        %v1718 = vadd.f32 0.0, %v1717
        %v1719 = vpop.f32.mrf.mxu0
        %v1720 = vadd.f32 0.0, %v1719
        %1721 = vmatmul.bf16.gmra.mxu0 %v1637
        %v1722 = vpop.f32.mrf.mxu0
        %v1723 = vadd.f32 0.0, %v1722
        %v1724 = vpop.f32.mrf.mxu0
        %v1725 = vadd.f32 0.0, %v1724
        %1726 = vmatmul.bf16.gmra.mxu0 %v1638
        %v1727 = vpop.f32.mrf.mxu0
        %v1728 = vadd.f32 0.0, %v1727
        %v1729 = vpop.f32.mrf.mxu0
        %v1730 = vadd.f32 0.0, %v1729
        %1731 = vdwg.mxu0
        %v1732 = vld [vmem:[%s9] sm:$0x1]
        %v1734 = vperm.slane %v1732, 0
        %v1736 = vmul.f32 %v1713, %v1734
        %v1737 = vmul.f32 %v1715, %v1734
        %v1738 = vmul.f32 %v1718, %v1734
        %v1739 = vmul.f32 %v1720, %v1734
        %v1740 = vmul.f32 %v1723, %v1734
        %v1741 = vmul.f32 %v1725, %v1734
        %v1742 = vmul.f32 %v1728, %v1734
        %v1743 = vmul.f32 %v1730, %v1734
        %v1744 = vld [vmem:[%s10] sm:$0x1]
        %v1746 = vperm.slane %v1744, 0
        %v1748 = vadd.f32 %v1736, %v1746
        %v1749 = vadd.f32 %v1737, %v1746
        %v1750 = vadd.f32 %v1738, %v1746
        %v1751 = vadd.f32 %v1739, %v1746
        %v1752 = vadd.f32 %v1740, %v1746
        %v1753 = vadd.f32 %v1741, %v1746
        %v1754 = vadd.f32 %v1742, %v1746
        %v1755 = vadd.f32 %v1743, %v1746
        %v1756 = vadd.f32 %v1619, %v1748
        %v1757 = vadd.f32 %v1620, %v1749
        %v1758 = vadd.f32 %v1621, %v1750
        %v1759 = vadd.f32 %v1622, %v1751
        %v1760 = vadd.f32 %v1623, %v1752
        %v1761 = vadd.f32 %v1624, %v1753
        %v1762 = vadd.f32 %v1625, %v1754
        %v1763 = vadd.f32 %v1626, %v1755
        %v1764 = vmax.f32 %v1756, 0.0
        %v1765 = vmax.f32 %v1757, 0.0
        %v1766 = vmax.f32 %v1758, 0.0
        %v1767 = vmax.f32 %v1759, 0.0
        %v1768 = vmax.f32 %v1760, 0.0
        %v1769 = vmax.f32 %v1761, 0.0
        %v1770 = vmax.f32 %v1762, 0.0
        %v1771 = vmax.f32 %v1763, 0.0
        %1772 = vst [vmem:[%s398] sm:$0xff] %v1764
        %1773 = vst [vmem:[%s398 + $0x8] sm:$0xff] %v1765
        %1774 = vst [vmem:[%s398 + $0x10] sm:$0xff] %v1766
        %1775 = vst [vmem:[%s398 + $0x18] sm:$0xff] %v1767
        %1776 = vst [vmem:[%s398 + $0x20] sm:$0xff] %v1768
        %1777 = vst [vmem:[%s398 + $0x28] sm:$0xff] %v1769
        %1778 = vst [vmem:[%s398 + $0x30] sm:$0xff] %v1770
        %1779 = vst [vmem:[%s398 + $0x38] sm:$0xff] %v1771
        %s1780 = sand.u32 %s274, 1
        %s1781 = scalar_lea.sflag [#allocation3], %s1780
        %s1782 = sand.u32 %s274, 1
        %s1783 = smul.addr %s1782, 64
        %s1784 = scalar_lea.vmem [#allocation2], %s1783
        // Predicated region
        $region65: #{_lambda_.3} parent=63 // pred_check
          %p1785 = pneg %p284
        $region66: #{_lambda_.3} parent=63 // pred_check_branch
          %1787 = sbr.rel (%p1785) target = $region68
        $region67: #{_lambda_.3} parent=63 // pred_region
          %s1788 = smul.u32 8, %s25
          %1790 = vsyncadd %s1781, 0
          %s1791 = smul.addr %s1788, 8
          %s1792 = scalar_lea.hbm %s11, %s1791
          %s1793 = sshll.u32 %s1784, 4
          %s1794 = int_to_ptr.vmem [resolvable:$true] %s1793
          %s1795 = sshll.u32 %s1792, 4
          %s1796 = int_to_ptr.hbm [resolvable:$true] %s1795
          %1801 = dma.vmem_to_hbm [thread:$0]  %s1794, 1024, %s1796, %s1781, 128, 128, 8
        $region68: #{_lambda_.3} parent=63 // pred_fallthru
          _
      $region64: #{_lambda_.3} parent=5 // pred_fallthru
        _
      %p1802 = scmp.le.s32.totalorder 2, %s20
      // Predicated region
      $region69: #{_lambda_.3} parent=5 // pred_check
        %p1803 = pneg %p1802
      $region70: #{_lambda_.3} parent=5 // pred_check_branch
        %1805 = sbr.rel (%p1803) target = $region72
      $region71: #{_lambda_.3} parent=5 // pred_region
        %s1806 = ssub.s32 %s20, 2
        // Predicated region
        $region73: #{_lambda_.3} parent=71 // pred_check
          %p1807 = pneg %p290
        $region74: #{_lambda_.3} parent=71 // pred_check_branch
          %1809 = sbr.rel (%p1807) target = $region76
        $region75: #{_lambda_.3} parent=71 // pred_region
          %s1810 = sand.u32 %s275, 1
          %s1811 = scalar_lea.sflag [#allocation3], %s1810
          %s1812 = sand.u32 %s275, 1
          %s1813 = smul.addr %s1812, 64
          %s1814 = scalar_lea.vmem [#allocation2], %s1813
          %1816 = dma.done %s1811, 1024
        $region76: #{_lambda_.3} parent=71 // pred_fallthru
          _
      $region72: #{_lambda_.3} parent=5 // pred_fallthru
        _
    $region6: #{_lambda_.3} parent=1 // loop_footer
      %s24 = sadd.s32 1, %s20
    $region7: #{_lambda_.3} parent=1 // loop_footer_branch
      %19 = sbr.rel target = $region3
    $region8: #{_lambda_.3} parent=1 // loop_exit
      _
    %1817 = vsyncpa [#allocation3], 1
    %s1818 = scalar_lea.sflag [#allocation3], 1
    %1819 = vsyncpa %s1818, 1

</llo_original>
